<compile_context>
chip_gen: v5e
topology: v5e:2x2
jax: 0.10.0
libtpu: 0.0.40
codegen_flags: <defaults>
</compile_context>

<pallas_src>
import functools

import jax
import jax.numpy as jnp
from jax import lax
from jax.experimental import pallas as pl
from jax.experimental.pallas import tpu as pltpu

IN_FEATURES = 1024
OUT_FEATURES = 768

# splitmix32-style avalanche constants, written as signed int32 literals.
_GOLD = -1640531535   # 0x9E3779B1
_MIX1 = -2048144789   # 0x85EBCA6B
_MIX2 = -1028477387   # 0xC2B2AE35


def _lsr(x, n):
    return lax.shift_right_logical(x, jnp.int32(n))


def _keep_mask(seed, row_off, shape):
    """Fair coin per output element, P(keep) = 0.5 (counter-based hash)."""
    rows = lax.broadcasted_iota(jnp.int32, shape, 0) + row_off
    cols = lax.broadcasted_iota(jnp.int32, shape, 1)
    idx = rows * jnp.int32(OUT_FEATURES) + cols       # global element index
    z = idx * jnp.int32(_GOLD) + seed                 # seeded Weyl sequence
    z = (z ^ _lsr(z, 16)) * jnp.int32(_MIX1)
    z = (z ^ _lsr(z, 13)) * jnp.int32(_MIX2)
    z = z ^ _lsr(z, 16)
    return z >= 0                                     # sign bit: P = 0.5


def _generator_kernel(seed_ref, x_ref, w_ref, b_ref, o_ref, *,
                      training: bool, tile_b: int):
    # Linear: (tile_b, 1024) @ (1024, 768) + (1, 768)  -> MXU, f32 accumulate.
    x = x_ref[...].astype(w_ref.dtype)                # bf16 weight -> bf16 MXU path
    y = jnp.dot(x, w_ref[...], preferred_element_type=jnp.float32)
    y = y + b_ref[...].astype(jnp.float32)
    y = jnp.tanh(y)                                   # EUP
    if training:
        # Dropout(p=0.5), inverted scaling (kept values * 2), as nn.Dropout.
        row_off = pl.program_id(0) * tile_b
        keep = _keep_mask(seed_ref[0], row_off, y.shape)
        y = jnp.where(keep, y * 2.0, 0.0)
    o_ref[...] = y.astype(o_ref.dtype)


def generator_forward(x, w_t, b, seed, training: bool = True, tile_b: int = 256):
    """x: (B, 1024) f32, w_t: (1024, 768) (bf16 recommended), b: (768,) f32.

    Returns (B, 768) in x.dtype.
    """
    B, in_f = x.shape
    assert in_f == IN_FEATURES
    assert w_t.shape == (IN_FEATURES, OUT_FEATURES)
    assert b.shape == (OUT_FEATURES,)

    tile_b = min(tile_b, B)
    grid = (pl.cdiv(B, tile_b),)

    kernel = functools.partial(_generator_kernel, training=training, tile_b=tile_b)

    grid_spec = pltpu.PrefetchScalarGridSpec(
        num_scalar_prefetch=1,          # seed lands in SMEM
        grid=grid,
        in_specs=[
            # x tile: streamed / double-buffered over the batch axis
            pl.BlockSpec((tile_b, IN_FEATURES), lambda i, seed: (i, 0)),
            # weight + bias: constant index_map -> DMA'd once, VMEM-resident
            pl.BlockSpec((IN_FEATURES, OUT_FEATURES), lambda i, seed: (0, 0)),
            pl.BlockSpec((1, OUT_FEATURES), lambda i, seed: (0, 0)),
        ],
        out_specs=pl.BlockSpec((tile_b, OUT_FEATURES), lambda i, seed: (i, 0)),
    )

    seed_arr = jnp.asarray(seed, jnp.int32).reshape((1,))
    return pl.pallas_call(
        kernel,
        out_shape=jax.ShapeDtypeStruct((B, OUT_FEATURES), x.dtype),
        grid_spec=grid_spec,
        compiler_params=pltpu.CompilerParams(
            dimension_semantics=("parallel",)),
    )(seed_arr, x, w_t, b.reshape(1, OUT_FEATURES))


if __name__ == "__main__":
    key = jax.random.PRNGKey(0)
    k_x, k_w, k_b = jax.random.split(key, 3)

    B = 8
    x = jax.random.normal(k_x, (B, IN_FEATURES), jnp.float32)

    # PyTorch-style Linear init, stored pre-transposed once, weight in bf16.
    bound = 1.0 / (IN_FEATURES ** 0.5)
    w = jax.random.uniform(k_w, (OUT_FEATURES, IN_FEATURES), jnp.float32, -bound, bound)
    b = jax.random.uniform(k_b, (OUT_FEATURES,), jnp.float32, -bound, bound)
    w_t = w.T.astype(jnp.bfloat16)      # (1024, 768), bf16

    # Eval-mode path (dropout = identity): check against a matching reference
    # (bf16 inputs to the dot, f32 accumulate — same math as the kernel).
    out_eval = generator_forward(x, w_t, b, seed=0, training=False)
    jax.block_until_ready(out_eval)
    ref_eval = jnp.tanh(
        jnp.dot(x.astype(jnp.bfloat16), w_t, preferred_element_type=jnp.float32) + b)
    assert out_eval.shape == (B, OUT_FEATURES)
    assert jnp.allclose(out_eval, ref_eval, atol=2e-3, rtol=2e-3), \
        float(jnp.max(jnp.abs(out_eval - ref_eval)))

    # Training-mode path (PyTorch default module mode): dropout with p=0.5.
    out_train = generator_forward(x, w_t, b, seed=1234, training=True)
    jax.block_until_ready(out_train)
    assert out_train.shape == (B, OUT_FEATURES)
    assert bool(jnp.all(jnp.isfinite(out_train)))
    # Dropped entries are exactly zero; kept entries are 2 * tanh(...).
    zero_frac = float(jnp.mean(out_train == 0.0))
    assert 0.3 < zero_frac < 0.7, zero_frac
    err = jnp.abs(out_train - 2.0 * ref_eval)
    assert bool(jnp.all((out_train == 0.0) | (err < 2e-3)))

    print("KERNEL_OK")
</pallas_src>

<mosaic_0001>
module attributes {stable_mosaic.version = 11 : i64} {
  func.func @_generator_kernel(%arg0: i32, %arg1: memref<1xi32, #tpu.memory_space<smem>>, %arg2: memref<8x1024xf32, #tpu.memory_space<vmem>>, %arg3: memref<1024x768xbf16, #tpu.memory_space<vmem>>, %arg4: memref<1x768xf32, #tpu.memory_space<vmem>>, %arg5: memref<8x768xf32, #tpu.memory_space<vmem>>) attributes {dimension_semantics = [#tpu.dimension_semantics<parallel>], iteration_bounds = array<i64: 1>, scalar_prefetch = 1 : i64, scratch_operands = 0 : i64, tpu.core_type = #tpu.core_type<tc>, window_params = [{transform_indices = @transform_0, window_bounds = array<i64: 8, 1024>}, {pipeline_mode = #tpu.pipeline_mode<synchronous>, transform_indices = @transform_1, window_bounds = array<i64: 1024, 768>}, {pipeline_mode = #tpu.pipeline_mode<synchronous>, transform_indices = @transform_2, window_bounds = array<i64: 1, 768>}, {transform_indices = @transform_3, window_bounds = array<i64: 8, 768>}]} {
    %c0 = arith.constant 0 : index
    %c0_0 = arith.constant 0 : index
    %0 = vector.load %arg2[%c0, %c0_0] : memref<8x1024xf32, #tpu.memory_space<vmem>>, vector<8x1024xf32>
    %1 = arith.truncf %0 : vector<8x1024xf32> to vector<8x1024xbf16>
    %c0_1 = arith.constant 0 : index
    %c0_2 = arith.constant 0 : index
    %2 = vector.load %arg3[%c0_1, %c0_2] : memref<1024x768xbf16, #tpu.memory_space<vmem>>, vector<1024x768xbf16>
    %cst = arith.constant dense<0.000000e+00> : vector<8x768xf32>
    %3 = tpu.matmul %1, %2, %cst {dimension_numbers = #tpu.dot_dimension_numbers<[1], [0], [0], [1], [0, 0, 1, 1], [], []>} : vector<8x1024xbf16>, vector<1024x768xbf16>, vector<8x768xf32> -> vector<8x768xf32>
    %c0_3 = arith.constant 0 : index
    %c0_4 = arith.constant 0 : index
    %4 = vector.load %arg4[%c0_3, %c0_4] : memref<1x768xf32, #tpu.memory_space<vmem>>, vector<1x768xf32>
    %5 = vector.broadcast %4 : vector<1x768xf32> to vector<8x768xf32>
    %6 = arith.addf %3, %5 : vector<8x768xf32>
    %7 = math.tanh %6 : vector<8x768xf32>
    %c0_5 = arith.constant 0 : index
    %c0_6 = arith.constant 0 : index
    %8 = vector.load %arg5[%c0_5, %c0_6] : memref<8x768xf32, #tpu.memory_space<vmem>>, vector<8x768xf32>
    tpu.vector_store %arg5[%c0_5, %c0_6], %7 {strides = array<i32>} : memref<8x768xf32, #tpu.memory_space<vmem>>, vector<8x768xf32>,
    return
  }
  func.func @transform_0(%arg0: i32, %arg1: memref<1xi32, #tpu.memory_space<smem>>) -> (i32, i32) {
    %c0_i32 = arith.constant 0 : i32
    %c0_i32_0 = arith.constant 0 : i32
    return %arg0, %c0_i32 : i32, i32
  }
  func.func @transform_1(%arg0: i32, %arg1: memref<1xi32, #tpu.memory_space<smem>>) -> (i32, i32) {
    %c0_i32 = arith.constant 0 : i32
    %c0_i32_0 = arith.constant 0 : i32
    %c0_i32_1 = arith.constant 0 : i32
    return %c0_i32, %c0_i32_0 : i32, i32
  }
  func.func @transform_2(%arg0: i32, %arg1: memref<1xi32, #tpu.memory_space<smem>>) -> (i32, i32) {
    %c0_i32 = arith.constant 0 : i32
    %c0_i32_0 = arith.constant 0 : i32
    %c0_i32_1 = arith.constant 0 : i32
    return %c0_i32, %c0_i32_0 : i32, i32
  }
  func.func @transform_3(%arg0: i32, %arg1: memref<1xi32, #tpu.memory_space<smem>>) -> (i32, i32) {
    %c0_i32 = arith.constant 0 : i32
    %c0_i32_0 = arith.constant 0 : i32
    return %arg0, %c0_i32 : i32, i32
  }
}

</mosaic_0001>

<llo_original>
// kernel: tpu_custom_call.1
$region0: #{tpu_custom_call.1}
  #allocation0 [shape = 'u32[]', space=smem, size = 0x4, offset = 0x4, fixed_abs, tag = 'smem constant byte address 0x4 - core index']
  #allocation1 [shape = 'u32[72,128]{1,0:T(1,128)}', space=vmem, size = 0x9000, scoped, tag = 'internal scratch']
  #allocation2 [shape = 's32[1]{0}', space=sflag, size = 0x4, scoped, tag = 'scoped memory for tpu_custom_call.1']
  #allocation3 [shape = 's32[1]{0:T(128)S(6)}', space=smem, size = 0x200, scoped, tag = 'prefetched SMEM operand 0']
  %s0 = inlined_call_operand.<no memory space> [shape: s32[1], index: 0, kind: input, shape index: {}]
  %s1 = inlined_call_operand.hbm [shape: f32[8,1024], index: 1, kind: input, shape index: {}]
  %s2 = inlined_call_operand.hbm [shape: bf16[1024,768], index: 2, kind: input, shape index: {}]
  %s3 = inlined_call_operand.hbm [shape: f32[1,768], index: 3, kind: input, shape index: {}]
  %s4 = inlined_call_operand.hbm [shape: f32[8,768], index: 4, kind: output, shape index: {}]
  %s5 = sld [smem:[#allocation0]]
  $region34: #{tpu_custom_call.1} parent=0
    _
  %s7 = ssub.s32 1, %s5
  %s8 = scalar_select 0, %s7, %s5
  %9 = sst [smem:[#allocation3]] %s0
  $region1: #{tpu_custom_call.1} parent=0
    #allocation4 [shape = 'u8[32768]{0}', space=vmem, size = 0x8000, scoped, tag = 'input window, operand 1, single buffered']
    #allocation5 [shape = 's32[1]{0}', space=sflag, size = 0x4, scoped, tag = 'scoped memory for tpu_custom_call.1']
    #allocation6 [shape = 's32[1]{0}', space=sflag, size = 0x4, scoped, tag = 'scoped memory for tpu_custom_call.1']
    #allocation7 [shape = 'u8[1572864]{0}', space=vmem, size = 0x180000, scoped, tag = 'input window, operand 2, single buffered']
    #allocation8 [shape = 's32[1]{0}', space=sflag, size = 0x4, scoped, tag = 'scoped memory for tpu_custom_call.1']
    #allocation9 [shape = 'u8[3072]{0}', space=vmem, size = 0xc00, scoped, tag = 'input window, operand 3, single buffered']
    #allocation10 [shape = 'u8[24576]{0}', space=vmem, size = 0x6000, scoped, tag = 'output window, operand 0, single buffered']
    %10 = vsyncpa [#allocation5], 0
    %11 = vsyncpa [#allocation8], 0
    %12 = vsyncpa [#allocation6], 0
    // Predicated region
    $region2: #{tpu_custom_call.1} parent=1 // pred_check
      _
    $region3: #{tpu_custom_call.1} parent=1 // pred_check_branch
      %14 = sbr.rel (0) target = $region5
    $region4: #{tpu_custom_call.1} parent=1 // pred_region
      %16 = vsyncadd [#allocation5], 0
      %s18 = sshll.u32 %s1, 4
      %s19 = int_to_ptr.hbm [resolvable:$true] %s18
      %s20 = sshll.u32 [#allocation4], 4
      %s21 = int_to_ptr.vmem [resolvable:$true] %s20
      %23 = dma.hbm_to_vmem [thread:$0]  %s19, 1024, %s21, [#allocation5]
    $region5: #{tpu_custom_call.1} parent=1 // pred_fallthru
      _
    // Predicated region
    $region6: #{tpu_custom_call.1} parent=1 // pred_check
      _
    $region7: #{tpu_custom_call.1} parent=1 // pred_check_branch
      %25 = sbr.rel (0) target = $region9
    $region8: #{tpu_custom_call.1} parent=1 // pred_region
      %27 = vsyncadd [#allocation8], 0
      %s28 = sshll.u32 %s2, 4
      %s29 = int_to_ptr.hbm [resolvable:$true] %s28
      %s30 = sshll.u32 [#allocation7], 4
      %s31 = int_to_ptr.vmem [resolvable:$true] %s30
      %36 = dma.hbm_to_vmem [thread:$0]  %s29, 49152, %s31, [#allocation8], 384, 384, 24
    $region9: #{tpu_custom_call.1} parent=1 // pred_fallthru
      _
    // Predicated region
    $region10: #{tpu_custom_call.1} parent=1 // pred_check
      _
    $region11: #{tpu_custom_call.1} parent=1 // pred_check_branch
      %38 = sbr.rel (0) target = $region13
    $region12: #{tpu_custom_call.1} parent=1 // pred_region
      %40 = vsyncadd [#allocation8], 0
      %s42 = sshll.u32 %s3, 4
      %s43 = int_to_ptr.hbm [resolvable:$true] %s42
      %s44 = sshll.u32 [#allocation9], 4
      %s45 = int_to_ptr.vmem [resolvable:$true] %s44
      %47 = dma.hbm_to_vmem [thread:$0]  %s43, 96, %s45, [#allocation8]
    $region13: #{tpu_custom_call.1} parent=1 // pred_fallthru
      _
    // Predicated region
    $region14: #{tpu_custom_call.1} parent=1 // pred_check
      _
    $region15: #{tpu_custom_call.1} parent=1 // pred_check_branch
      %49 = sbr.rel (0) target = $region17
    $region16: #{tpu_custom_call.1} parent=1 // pred_region
      %51 = dma.done [#allocation5], 1024
    $region17: #{tpu_custom_call.1} parent=1 // pred_fallthru
      _
    // Predicated region
    $region18: #{tpu_custom_call.1} parent=1 // pred_check
      _
    $region19: #{tpu_custom_call.1} parent=1 // pred_check_branch
      %53 = sbr.rel (0) target = $region21
    $region20: #{tpu_custom_call.1} parent=1 // pred_region
      %55 = dma.done [#allocation8], 49152
    $region21: #{tpu_custom_call.1} parent=1 // pred_fallthru
      _
    // Predicated region
    $region22: #{tpu_custom_call.1} parent=1 // pred_check
      _
    $region23: #{tpu_custom_call.1} parent=1 // pred_check_branch
      %57 = sbr.rel (0) target = $region25
    $region24: #{tpu_custom_call.1} parent=1 // pred_region
      %59 = dma.done [#allocation8], 96
    $region25: #{tpu_custom_call.1} parent=1 // pred_fallthru
      _
    %v60 = vld [vmem:[#allocation4] sm:$0xff]
    %v61 = vld [vmem:[#allocation4 + $0x8] sm:$0xff]
    %v62 = vld [vmem:[#allocation4 + $0x10] sm:$0xff]
    %v63 = vld [vmem:[#allocation4 + $0x18] sm:$0xff]
    %v64 = vld [vmem:[#allocation4 + $0x20] sm:$0xff]
    %v65 = vld [vmem:[#allocation4 + $0x28] sm:$0xff]
    %v66 = vld [vmem:[#allocation4 + $0x30] sm:$0xff]
    %v67 = vld [vmem:[#allocation4 + $0x38] sm:$0xff]
    %v68 = vpack.c.bf16 %v60, %v60
    %v69 = vpack.c.bf16 %v61, %v61
    %v70 = vpack.c.bf16 %v62, %v62
    %v71 = vpack.c.bf16 %v63, %v63
    %v72 = vpack.c.bf16 %v64, %v64
    %v73 = vpack.c.bf16 %v65, %v65
    %v74 = vpack.c.bf16 %v66, %v66
    %v75 = vpack.c.bf16 %v67, %v67
    %v76 = vld [vmem:[#allocation7] sm:$0xff]
    %v77 = vld [vmem:[#allocation7 + $0x8] sm:$0xff]
    %v78 = vld [vmem:[#allocation7 + $0x10] sm:$0xff]
    %v79 = vld [vmem:[#allocation7 + $0x18] sm:$0xff]
    %v80 = vld [vmem:[#allocation7 + $0x20] sm:$0xff]
    %v81 = vld [vmem:[#allocation7 + $0x28] sm:$0xff]
    %v82 = vld [vmem:[#allocation7 + $0x30] sm:$0xff]
    %v83 = vld [vmem:[#allocation7 + $0x38] sm:$0xff]
    %v84 = vld [vmem:[#allocation7 + $0x40] sm:$0xff]
    %v85 = vld [vmem:[#allocation7 + $0x48] sm:$0xff]
    %v86 = vld [vmem:[#allocation7 + $0x50] sm:$0xff]
    %v87 = vld [vmem:[#allocation7 + $0x58] sm:$0xff]
    %v88 = vld [vmem:[#allocation7 + $0x60] sm:$0xff]
    %v89 = vld [vmem:[#allocation7 + $0x68] sm:$0xff]
    %v90 = vld [vmem:[#allocation7 + $0x70] sm:$0xff]
    %v91 = vld [vmem:[#allocation7 + $0x78] sm:$0xff]
    %v92 = vld [vmem:[#allocation7 + $0x80] sm:$0xff]
    %v93 = vld [vmem:[#allocation7 + $0x88] sm:$0xff]
    %v94 = vld [vmem:[#allocation7 + $0x90] sm:$0xff]
    %v95 = vld [vmem:[#allocation7 + $0x98] sm:$0xff]
    %v96 = vld [vmem:[#allocation7 + $0xa0] sm:$0xff]
    %v97 = vld [vmem:[#allocation7 + $0xa8] sm:$0xff]
    %v98 = vld [vmem:[#allocation7 + $0xb0] sm:$0xff]
    %v99 = vld [vmem:[#allocation7 + $0xb8] sm:$0xff]
    %v100 = vld [vmem:[#allocation7 + $0xc0] sm:$0xff]
    %v101 = vld [vmem:[#allocation7 + $0xc8] sm:$0xff]
    %v102 = vld [vmem:[#allocation7 + $0xd0] sm:$0xff]
    %v103 = vld [vmem:[#allocation7 + $0xd8] sm:$0xff]
    %v104 = vld [vmem:[#allocation7 + $0xe0] sm:$0xff]
    %v105 = vld [vmem:[#allocation7 + $0xe8] sm:$0xff]
    %v106 = vld [vmem:[#allocation7 + $0xf0] sm:$0xff]
    %v107 = vld [vmem:[#allocation7 + $0xf8] sm:$0xff]
    %v108 = vld [vmem:[#allocation7 + $0x100] sm:$0xff]
    %v109 = vld [vmem:[#allocation7 + $0x108] sm:$0xff]
    %v110 = vld [vmem:[#allocation7 + $0x110] sm:$0xff]
    %v111 = vld [vmem:[#allocation7 + $0x118] sm:$0xff]
    %v112 = vld [vmem:[#allocation7 + $0x120] sm:$0xff]
    %v113 = vld [vmem:[#allocation7 + $0x128] sm:$0xff]
    %v114 = vld [vmem:[#allocation7 + $0x130] sm:$0xff]
    %v115 = vld [vmem:[#allocation7 + $0x138] sm:$0xff]
    %v116 = vld [vmem:[#allocation7 + $0x140] sm:$0xff]
    %v117 = vld [vmem:[#allocation7 + $0x148] sm:$0xff]
    %v118 = vld [vmem:[#allocation7 + $0x150] sm:$0xff]
    %v119 = vld [vmem:[#allocation7 + $0x158] sm:$0xff]
    %v120 = vld [vmem:[#allocation7 + $0x160] sm:$0xff]
    %v121 = vld [vmem:[#allocation7 + $0x168] sm:$0xff]
    %v122 = vld [vmem:[#allocation7 + $0x170] sm:$0xff]
    %v123 = vld [vmem:[#allocation7 + $0x178] sm:$0xff]
    %v124 = vld [vmem:[#allocation7 + $0x180] sm:$0xff]
    %v125 = vld [vmem:[#allocation7 + $0x188] sm:$0xff]
    %v126 = vld [vmem:[#allocation7 + $0x190] sm:$0xff]
    %v127 = vld [vmem:[#allocation7 + $0x198] sm:$0xff]
    %v128 = vld [vmem:[#allocation7 + $0x1a0] sm:$0xff]
    %v129 = vld [vmem:[#allocation7 + $0x1a8] sm:$0xff]
    %v130 = vld [vmem:[#allocation7 + $0x1b0] sm:$0xff]
    %v131 = vld [vmem:[#allocation7 + $0x1b8] sm:$0xff]
    %v132 = vld [vmem:[#allocation7 + $0x1c0] sm:$0xff]
    %v133 = vld [vmem:[#allocation7 + $0x1c8] sm:$0xff]
    %v134 = vld [vmem:[#allocation7 + $0x1d0] sm:$0xff]
    %v135 = vld [vmem:[#allocation7 + $0x1d8] sm:$0xff]
    %v136 = vld [vmem:[#allocation7 + $0x1e0] sm:$0xff]
    %v137 = vld [vmem:[#allocation7 + $0x1e8] sm:$0xff]
    %v138 = vld [vmem:[#allocation7 + $0x1f0] sm:$0xff]
    %v139 = vld [vmem:[#allocation7 + $0x1f8] sm:$0xff]
    %v140 = vld [vmem:[#allocation7 + $0x200] sm:$0xff]
    %v141 = vld [vmem:[#allocation7 + $0x208] sm:$0xff]
    %v142 = vld [vmem:[#allocation7 + $0x210] sm:$0xff]
    %v143 = vld [vmem:[#allocation7 + $0x218] sm:$0xff]
    %v144 = vld [vmem:[#allocation7 + $0x220] sm:$0xff]
    %v145 = vld [vmem:[#allocation7 + $0x228] sm:$0xff]
    %v146 = vld [vmem:[#allocation7 + $0x230] sm:$0xff]
    %v147 = vld [vmem:[#allocation7 + $0x238] sm:$0xff]
    %v148 = vld [vmem:[#allocation7 + $0x240] sm:$0xff]
    %v149 = vld [vmem:[#allocation7 + $0x248] sm:$0xff]
    %v150 = vld [vmem:[#allocation7 + $0x250] sm:$0xff]
    %v151 = vld [vmem:[#allocation7 + $0x258] sm:$0xff]
    %v152 = vld [vmem:[#allocation7 + $0x260] sm:$0xff]
    %v153 = vld [vmem:[#allocation7 + $0x268] sm:$0xff]
    %v154 = vld [vmem:[#allocation7 + $0x270] sm:$0xff]
    %v155 = vld [vmem:[#allocation7 + $0x278] sm:$0xff]
    %v156 = vld [vmem:[#allocation7 + $0x280] sm:$0xff]
    %v157 = vld [vmem:[#allocation7 + $0x288] sm:$0xff]
    %v158 = vld [vmem:[#allocation7 + $0x290] sm:$0xff]
    %v159 = vld [vmem:[#allocation7 + $0x298] sm:$0xff]
    %v160 = vld [vmem:[#allocation7 + $0x2a0] sm:$0xff]
    %v161 = vld [vmem:[#allocation7 + $0x2a8] sm:$0xff]
    %v162 = vld [vmem:[#allocation7 + $0x2b0] sm:$0xff]
    %v163 = vld [vmem:[#allocation7 + $0x2b8] sm:$0xff]
    %v164 = vld [vmem:[#allocation7 + $0x2c0] sm:$0xff]
    %v165 = vld [vmem:[#allocation7 + $0x2c8] sm:$0xff]
    %v166 = vld [vmem:[#allocation7 + $0x2d0] sm:$0xff]
    %v167 = vld [vmem:[#allocation7 + $0x2d8] sm:$0xff]
    %v168 = vld [vmem:[#allocation7 + $0x2e0] sm:$0xff]
    %v169 = vld [vmem:[#allocation7 + $0x2e8] sm:$0xff]
    %v170 = vld [vmem:[#allocation7 + $0x2f0] sm:$0xff]
    %v171 = vld [vmem:[#allocation7 + $0x2f8] sm:$0xff]
    %v172 = vld [vmem:[#allocation7 + $0x300] sm:$0xff]
    %v173 = vld [vmem:[#allocation7 + $0x308] sm:$0xff]
    %v174 = vld [vmem:[#allocation7 + $0x310] sm:$0xff]
    %v175 = vld [vmem:[#allocation7 + $0x318] sm:$0xff]
    %v176 = vld [vmem:[#allocation7 + $0x320] sm:$0xff]
    %v177 = vld [vmem:[#allocation7 + $0x328] sm:$0xff]
    %v178 = vld [vmem:[#allocation7 + $0x330] sm:$0xff]
    %v179 = vld [vmem:[#allocation7 + $0x338] sm:$0xff]
    %v180 = vld [vmem:[#allocation7 + $0x340] sm:$0xff]
    %v181 = vld [vmem:[#allocation7 + $0x348] sm:$0xff]
    %v182 = vld [vmem:[#allocation7 + $0x350] sm:$0xff]
    %v183 = vld [vmem:[#allocation7 + $0x358] sm:$0xff]
    %v184 = vld [vmem:[#allocation7 + $0x360] sm:$0xff]
    %v185 = vld [vmem:[#allocation7 + $0x368] sm:$0xff]
    %v186 = vld [vmem:[#allocation7 + $0x370] sm:$0xff]
    %v187 = vld [vmem:[#allocation7 + $0x378] sm:$0xff]
    %v188 = vld [vmem:[#allocation7 + $0x380] sm:$0xff]
    %v189 = vld [vmem:[#allocation7 + $0x388] sm:$0xff]
    %v190 = vld [vmem:[#allocation7 + $0x390] sm:$0xff]
    %v191 = vld [vmem:[#allocation7 + $0x398] sm:$0xff]
    %v192 = vld [vmem:[#allocation7 + $0x3a0] sm:$0xff]
    %v193 = vld [vmem:[#allocation7 + $0x3a8] sm:$0xff]
    %v194 = vld [vmem:[#allocation7 + $0x3b0] sm:$0xff]
    %v195 = vld [vmem:[#allocation7 + $0x3b8] sm:$0xff]
    %v196 = vld [vmem:[#allocation7 + $0x3c0] sm:$0xff]
    %v197 = vld [vmem:[#allocation7 + $0x3c8] sm:$0xff]
    %v198 = vld [vmem:[#allocation7 + $0x3d0] sm:$0xff]
    %v199 = vld [vmem:[#allocation7 + $0x3d8] sm:$0xff]
    %v200 = vld [vmem:[#allocation7 + $0x3e0] sm:$0xff]
    %v201 = vld [vmem:[#allocation7 + $0x3e8] sm:$0xff]
    %v202 = vld [vmem:[#allocation7 + $0x3f0] sm:$0xff]
    %v203 = vld [vmem:[#allocation7 + $0x3f8] sm:$0xff]
    %v204 = vld [vmem:[#allocation7 + $0x400] sm:$0xff]
    %v205 = vld [vmem:[#allocation7 + $0x408] sm:$0xff]
    %v206 = vld [vmem:[#allocation7 + $0x410] sm:$0xff]
    %v207 = vld [vmem:[#allocation7 + $0x418] sm:$0xff]
    %v208 = vld [vmem:[#allocation7 + $0x420] sm:$0xff]
    %v209 = vld [vmem:[#allocation7 + $0x428] sm:$0xff]
    %v210 = vld [vmem:[#allocation7 + $0x430] sm:$0xff]
    %v211 = vld [vmem:[#allocation7 + $0x438] sm:$0xff]
    %v212 = vld [vmem:[#allocation7 + $0x440] sm:$0xff]
    %v213 = vld [vmem:[#allocation7 + $0x448] sm:$0xff]
    %v214 = vld [vmem:[#allocation7 + $0x450] sm:$0xff]
    %v215 = vld [vmem:[#allocation7 + $0x458] sm:$0xff]
    %v216 = vld [vmem:[#allocation7 + $0x460] sm:$0xff]
    %v217 = vld [vmem:[#allocation7 + $0x468] sm:$0xff]
    %v218 = vld [vmem:[#allocation7 + $0x470] sm:$0xff]
    %v219 = vld [vmem:[#allocation7 + $0x478] sm:$0xff]
    %v220 = vld [vmem:[#allocation7 + $0x480] sm:$0xff]
    %v221 = vld [vmem:[#allocation7 + $0x488] sm:$0xff]
    %v222 = vld [vmem:[#allocation7 + $0x490] sm:$0xff]
    %v223 = vld [vmem:[#allocation7 + $0x498] sm:$0xff]
    %v224 = vld [vmem:[#allocation7 + $0x4a0] sm:$0xff]
    %v225 = vld [vmem:[#allocation7 + $0x4a8] sm:$0xff]
    %v226 = vld [vmem:[#allocation7 + $0x4b0] sm:$0xff]
    %v227 = vld [vmem:[#allocation7 + $0x4b8] sm:$0xff]
    %v228 = vld [vmem:[#allocation7 + $0x4c0] sm:$0xff]
    %v229 = vld [vmem:[#allocation7 + $0x4c8] sm:$0xff]
    %v230 = vld [vmem:[#allocation7 + $0x4d0] sm:$0xff]
    %v231 = vld [vmem:[#allocation7 + $0x4d8] sm:$0xff]
    %v232 = vld [vmem:[#allocation7 + $0x4e0] sm:$0xff]
    %v233 = vld [vmem:[#allocation7 + $0x4e8] sm:$0xff]
    %v234 = vld [vmem:[#allocation7 + $0x4f0] sm:$0xff]
    %v235 = vld [vmem:[#allocation7 + $0x4f8] sm:$0xff]
    %v236 = vld [vmem:[#allocation7 + $0x500] sm:$0xff]
    %v237 = vld [vmem:[#allocation7 + $0x508] sm:$0xff]
    %v238 = vld [vmem:[#allocation7 + $0x510] sm:$0xff]
    %v239 = vld [vmem:[#allocation7 + $0x518] sm:$0xff]
    %v240 = vld [vmem:[#allocation7 + $0x520] sm:$0xff]
    %v241 = vld [vmem:[#allocation7 + $0x528] sm:$0xff]
    %v242 = vld [vmem:[#allocation7 + $0x530] sm:$0xff]
    %v243 = vld [vmem:[#allocation7 + $0x538] sm:$0xff]
    %v244 = vld [vmem:[#allocation7 + $0x540] sm:$0xff]
    %v245 = vld [vmem:[#allocation7 + $0x548] sm:$0xff]
    %v246 = vld [vmem:[#allocation7 + $0x550] sm:$0xff]
    %v247 = vld [vmem:[#allocation7 + $0x558] sm:$0xff]
    %v248 = vld [vmem:[#allocation7 + $0x560] sm:$0xff]
    %v249 = vld [vmem:[#allocation7 + $0x568] sm:$0xff]
    %v250 = vld [vmem:[#allocation7 + $0x570] sm:$0xff]
    %v251 = vld [vmem:[#allocation7 + $0x578] sm:$0xff]
    %v252 = vld [vmem:[#allocation7 + $0x580] sm:$0xff]
    %v253 = vld [vmem:[#allocation7 + $0x588] sm:$0xff]
    %v254 = vld [vmem:[#allocation7 + $0x590] sm:$0xff]
    %v255 = vld [vmem:[#allocation7 + $0x598] sm:$0xff]
    %v256 = vld [vmem:[#allocation7 + $0x5a0] sm:$0xff]
    %v257 = vld [vmem:[#allocation7 + $0x5a8] sm:$0xff]
    %v258 = vld [vmem:[#allocation7 + $0x5b0] sm:$0xff]
    %v259 = vld [vmem:[#allocation7 + $0x5b8] sm:$0xff]
    %v260 = vld [vmem:[#allocation7 + $0x5c0] sm:$0xff]
    %v261 = vld [vmem:[#allocation7 + $0x5c8] sm:$0xff]
    %v262 = vld [vmem:[#allocation7 + $0x5d0] sm:$0xff]
    %v263 = vld [vmem:[#allocation7 + $0x5d8] sm:$0xff]
    %v264 = vld [vmem:[#allocation7 + $0x5e0] sm:$0xff]
    %v265 = vld [vmem:[#allocation7 + $0x5e8] sm:$0xff]
    %v266 = vld [vmem:[#allocation7 + $0x5f0] sm:$0xff]
    %v267 = vld [vmem:[#allocation7 + $0x5f8] sm:$0xff]
    %v268 = vld [vmem:[#allocation7 + $0x600] sm:$0xff]
    %v269 = vld [vmem:[#allocation7 + $0x608] sm:$0xff]
    %v270 = vld [vmem:[#allocation7 + $0x610] sm:$0xff]
    %v271 = vld [vmem:[#allocation7 + $0x618] sm:$0xff]
    %v272 = vld [vmem:[#allocation7 + $0x620] sm:$0xff]
    %v273 = vld [vmem:[#allocation7 + $0x628] sm:$0xff]
    %v274 = vld [vmem:[#allocation7 + $0x630] sm:$0xff]
    %v275 = vld [vmem:[#allocation7 + $0x638] sm:$0xff]
    %v276 = vld [vmem:[#allocation7 + $0x640] sm:$0xff]
    %v277 = vld [vmem:[#allocation7 + $0x648] sm:$0xff]
    %v278 = vld [vmem:[#allocation7 + $0x650] sm:$0xff]
    %v279 = vld [vmem:[#allocation7 + $0x658] sm:$0xff]
    %v280 = vld [vmem:[#allocation7 + $0x660] sm:$0xff]
    %v281 = vld [vmem:[#allocation7 + $0x668] sm:$0xff]
    %v282 = vld [vmem:[#allocation7 + $0x670] sm:$0xff]
    %v283 = vld [vmem:[#allocation7 + $0x678] sm:$0xff]
    %v284 = vld [vmem:[#allocation7 + $0x680] sm:$0xff]
    %v285 = vld [vmem:[#allocation7 + $0x688] sm:$0xff]
    %v286 = vld [vmem:[#allocation7 + $0x690] sm:$0xff]
    %v287 = vld [vmem:[#allocation7 + $0x698] sm:$0xff]
    %v288 = vld [vmem:[#allocation7 + $0x6a0] sm:$0xff]
    %v289 = vld [vmem:[#allocation7 + $0x6a8] sm:$0xff]
    %v290 = vld [vmem:[#allocation7 + $0x6b0] sm:$0xff]
    %v291 = vld [vmem:[#allocation7 + $0x6b8] sm:$0xff]
    %v292 = vld [vmem:[#allocation7 + $0x6c0] sm:$0xff]
    %v293 = vld [vmem:[#allocation7 + $0x6c8] sm:$0xff]
    %v294 = vld [vmem:[#allocation7 + $0x6d0] sm:$0xff]
    %v295 = vld [vmem:[#allocation7 + $0x6d8] sm:$0xff]
    %v296 = vld [vmem:[#allocation7 + $0x6e0] sm:$0xff]
    %v297 = vld [vmem:[#allocation7 + $0x6e8] sm:$0xff]
    %v298 = vld [vmem:[#allocation7 + $0x6f0] sm:$0xff]
    %v299 = vld [vmem:[#allocation7 + $0x6f8] sm:$0xff]
    %v300 = vld [vmem:[#allocation7 + $0x700] sm:$0xff]
    %v301 = vld [vmem:[#allocation7 + $0x708] sm:$0xff]
    %v302 = vld [vmem:[#allocation7 + $0x710] sm:$0xff]
    %v303 = vld [vmem:[#allocation7 + $0x718] sm:$0xff]
    %v304 = vld [vmem:[#allocation7 + $0x720] sm:$0xff]
    %v305 = vld [vmem:[#allocation7 + $0x728] sm:$0xff]
    %v306 = vld [vmem:[#allocation7 + $0x730] sm:$0xff]
    %v307 = vld [vmem:[#allocation7 + $0x738] sm:$0xff]
    %v308 = vld [vmem:[#allocation7 + $0x740] sm:$0xff]
    %v309 = vld [vmem:[#allocation7 + $0x748] sm:$0xff]
    %v310 = vld [vmem:[#allocation7 + $0x750] sm:$0xff]
    %v311 = vld [vmem:[#allocation7 + $0x758] sm:$0xff]
    %v312 = vld [vmem:[#allocation7 + $0x760] sm:$0xff]
    %v313 = vld [vmem:[#allocation7 + $0x768] sm:$0xff]
    %v314 = vld [vmem:[#allocation7 + $0x770] sm:$0xff]
    %v315 = vld [vmem:[#allocation7 + $0x778] sm:$0xff]
    %v316 = vld [vmem:[#allocation7 + $0x780] sm:$0xff]
    %v317 = vld [vmem:[#allocation7 + $0x788] sm:$0xff]
    %v318 = vld [vmem:[#allocation7 + $0x790] sm:$0xff]
    %v319 = vld [vmem:[#allocation7 + $0x798] sm:$0xff]
    %v320 = vld [vmem:[#allocation7 + $0x7a0] sm:$0xff]
    %v321 = vld [vmem:[#allocation7 + $0x7a8] sm:$0xff]
    %v322 = vld [vmem:[#allocation7 + $0x7b0] sm:$0xff]
    %v323 = vld [vmem:[#allocation7 + $0x7b8] sm:$0xff]
    %v324 = vld [vmem:[#allocation7 + $0x7c0] sm:$0xff]
    %v325 = vld [vmem:[#allocation7 + $0x7c8] sm:$0xff]
    %v326 = vld [vmem:[#allocation7 + $0x7d0] sm:$0xff]
    %v327 = vld [vmem:[#allocation7 + $0x7d8] sm:$0xff]
    %v328 = vld [vmem:[#allocation7 + $0x7e0] sm:$0xff]
    %v329 = vld [vmem:[#allocation7 + $0x7e8] sm:$0xff]
    %v330 = vld [vmem:[#allocation7 + $0x7f0] sm:$0xff]
    %v331 = vld [vmem:[#allocation7 + $0x7f8] sm:$0xff]
    %v332 = vld [vmem:[#allocation7 + $0x800] sm:$0xff]
    %v333 = vld [vmem:[#allocation7 + $0x808] sm:$0xff]
    %v334 = vld [vmem:[#allocation7 + $0x810] sm:$0xff]
    %v335 = vld [vmem:[#allocation7 + $0x818] sm:$0xff]
    %v336 = vld [vmem:[#allocation7 + $0x820] sm:$0xff]
    %v337 = vld [vmem:[#allocation7 + $0x828] sm:$0xff]
    %v338 = vld [vmem:[#allocation7 + $0x830] sm:$0xff]
    %v339 = vld [vmem:[#allocation7 + $0x838] sm:$0xff]
    %v340 = vld [vmem:[#allocation7 + $0x840] sm:$0xff]
    %v341 = vld [vmem:[#allocation7 + $0x848] sm:$0xff]
    %v342 = vld [vmem:[#allocation7 + $0x850] sm:$0xff]
    %v343 = vld [vmem:[#allocation7 + $0x858] sm:$0xff]
    %v344 = vld [vmem:[#allocation7 + $0x860] sm:$0xff]
    %v345 = vld [vmem:[#allocation7 + $0x868] sm:$0xff]
    %v346 = vld [vmem:[#allocation7 + $0x870] sm:$0xff]
    %v347 = vld [vmem:[#allocation7 + $0x878] sm:$0xff]
    %v348 = vld [vmem:[#allocation7 + $0x880] sm:$0xff]
    %v349 = vld [vmem:[#allocation7 + $0x888] sm:$0xff]
    %v350 = vld [vmem:[#allocation7 + $0x890] sm:$0xff]
    %v351 = vld [vmem:[#allocation7 + $0x898] sm:$0xff]
    %v352 = vld [vmem:[#allocation7 + $0x8a0] sm:$0xff]
    %v353 = vld [vmem:[#allocation7 + $0x8a8] sm:$0xff]
    %v354 = vld [vmem:[#allocation7 + $0x8b0] sm:$0xff]
    %v355 = vld [vmem:[#allocation7 + $0x8b8] sm:$0xff]
    %v356 = vld [vmem:[#allocation7 + $0x8c0] sm:$0xff]
    %v357 = vld [vmem:[#allocation7 + $0x8c8] sm:$0xff]
    %v358 = vld [vmem:[#allocation7 + $0x8d0] sm:$0xff]
    %v359 = vld [vmem:[#allocation7 + $0x8d8] sm:$0xff]
    %v360 = vld [vmem:[#allocation7 + $0x8e0] sm:$0xff]
    %v361 = vld [vmem:[#allocation7 + $0x8e8] sm:$0xff]
    %v362 = vld [vmem:[#allocation7 + $0x8f0] sm:$0xff]
    %v363 = vld [vmem:[#allocation7 + $0x8f8] sm:$0xff]
    %v364 = vld [vmem:[#allocation7 + $0x900] sm:$0xff]
    %v365 = vld [vmem:[#allocation7 + $0x908] sm:$0xff]
    %v366 = vld [vmem:[#allocation7 + $0x910] sm:$0xff]
    %v367 = vld [vmem:[#allocation7 + $0x918] sm:$0xff]
    %v368 = vld [vmem:[#allocation7 + $0x920] sm:$0xff]
    %v369 = vld [vmem:[#allocation7 + $0x928] sm:$0xff]
    %v370 = vld [vmem:[#allocation7 + $0x930] sm:$0xff]
    %v371 = vld [vmem:[#allocation7 + $0x938] sm:$0xff]
    %v372 = vld [vmem:[#allocation7 + $0x940] sm:$0xff]
    %v373 = vld [vmem:[#allocation7 + $0x948] sm:$0xff]
    %v374 = vld [vmem:[#allocation7 + $0x950] sm:$0xff]
    %v375 = vld [vmem:[#allocation7 + $0x958] sm:$0xff]
    %v376 = vld [vmem:[#allocation7 + $0x960] sm:$0xff]
    %v377 = vld [vmem:[#allocation7 + $0x968] sm:$0xff]
    %v378 = vld [vmem:[#allocation7 + $0x970] sm:$0xff]
    %v379 = vld [vmem:[#allocation7 + $0x978] sm:$0xff]
    %v380 = vld [vmem:[#allocation7 + $0x980] sm:$0xff]
    %v381 = vld [vmem:[#allocation7 + $0x988] sm:$0xff]
    %v382 = vld [vmem:[#allocation7 + $0x990] sm:$0xff]
    %v383 = vld [vmem:[#allocation7 + $0x998] sm:$0xff]
    %v384 = vld [vmem:[#allocation7 + $0x9a0] sm:$0xff]
    %v385 = vld [vmem:[#allocation7 + $0x9a8] sm:$0xff]
    %v386 = vld [vmem:[#allocation7 + $0x9b0] sm:$0xff]
    %v387 = vld [vmem:[#allocation7 + $0x9b8] sm:$0xff]
    %v388 = vld [vmem:[#allocation7 + $0x9c0] sm:$0xff]
    %v389 = vld [vmem:[#allocation7 + $0x9c8] sm:$0xff]
    %v390 = vld [vmem:[#allocation7 + $0x9d0] sm:$0xff]
    %v391 = vld [vmem:[#allocation7 + $0x9d8] sm:$0xff]
    %v392 = vld [vmem:[#allocation7 + $0x9e0] sm:$0xff]
    %v393 = vld [vmem:[#allocation7 + $0x9e8] sm:$0xff]
    %v394 = vld [vmem:[#allocation7 + $0x9f0] sm:$0xff]
    %v395 = vld [vmem:[#allocation7 + $0x9f8] sm:$0xff]
    %v396 = vld [vmem:[#allocation7 + $0xa00] sm:$0xff]
    %v397 = vld [vmem:[#allocation7 + $0xa08] sm:$0xff]
    %v398 = vld [vmem:[#allocation7 + $0xa10] sm:$0xff]
    %v399 = vld [vmem:[#allocation7 + $0xa18] sm:$0xff]
    %v400 = vld [vmem:[#allocation7 + $0xa20] sm:$0xff]
    %v401 = vld [vmem:[#allocation7 + $0xa28] sm:$0xff]
    %v402 = vld [vmem:[#allocation7 + $0xa30] sm:$0xff]
    %v403 = vld [vmem:[#allocation7 + $0xa38] sm:$0xff]
    %v404 = vld [vmem:[#allocation7 + $0xa40] sm:$0xff]
    %v405 = vld [vmem:[#allocation7 + $0xa48] sm:$0xff]
    %v406 = vld [vmem:[#allocation7 + $0xa50] sm:$0xff]
    %v407 = vld [vmem:[#allocation7 + $0xa58] sm:$0xff]
    %v408 = vld [vmem:[#allocation7 + $0xa60] sm:$0xff]
    %v409 = vld [vmem:[#allocation7 + $0xa68] sm:$0xff]
    %v410 = vld [vmem:[#allocation7 + $0xa70] sm:$0xff]
    %v411 = vld [vmem:[#allocation7 + $0xa78] sm:$0xff]
    %v412 = vld [vmem:[#allocation7 + $0xa80] sm:$0xff]
    %v413 = vld [vmem:[#allocation7 + $0xa88] sm:$0xff]
    %v414 = vld [vmem:[#allocation7 + $0xa90] sm:$0xff]
    %v415 = vld [vmem:[#allocation7 + $0xa98] sm:$0xff]
    %v416 = vld [vmem:[#allocation7 + $0xaa0] sm:$0xff]
    %v417 = vld [vmem:[#allocation7 + $0xaa8] sm:$0xff]
    %v418 = vld [vmem:[#allocation7 + $0xab0] sm:$0xff]
    %v419 = vld [vmem:[#allocation7 + $0xab8] sm:$0xff]
    %v420 = vld [vmem:[#allocation7 + $0xac0] sm:$0xff]
    %v421 = vld [vmem:[#allocation7 + $0xac8] sm:$0xff]
    %v422 = vld [vmem:[#allocation7 + $0xad0] sm:$0xff]
    %v423 = vld [vmem:[#allocation7 + $0xad8] sm:$0xff]
    %v424 = vld [vmem:[#allocation7 + $0xae0] sm:$0xff]
    %v425 = vld [vmem:[#allocation7 + $0xae8] sm:$0xff]
    %v426 = vld [vmem:[#allocation7 + $0xaf0] sm:$0xff]
    %v427 = vld [vmem:[#allocation7 + $0xaf8] sm:$0xff]
    %v428 = vld [vmem:[#allocation7 + $0xb00] sm:$0xff]
    %v429 = vld [vmem:[#allocation7 + $0xb08] sm:$0xff]
    %v430 = vld [vmem:[#allocation7 + $0xb10] sm:$0xff]
    %v431 = vld [vmem:[#allocation7 + $0xb18] sm:$0xff]
    %v432 = vld [vmem:[#allocation7 + $0xb20] sm:$0xff]
    %v433 = vld [vmem:[#allocation7 + $0xb28] sm:$0xff]
    %v434 = vld [vmem:[#allocation7 + $0xb30] sm:$0xff]
    %v435 = vld [vmem:[#allocation7 + $0xb38] sm:$0xff]
    %v436 = vld [vmem:[#allocation7 + $0xb40] sm:$0xff]
    %v437 = vld [vmem:[#allocation7 + $0xb48] sm:$0xff]
    %v438 = vld [vmem:[#allocation7 + $0xb50] sm:$0xff]
    %v439 = vld [vmem:[#allocation7 + $0xb58] sm:$0xff]
    %v440 = vld [vmem:[#allocation7 + $0xb60] sm:$0xff]
    %v441 = vld [vmem:[#allocation7 + $0xb68] sm:$0xff]
    %v442 = vld [vmem:[#allocation7 + $0xb70] sm:$0xff]
    %v443 = vld [vmem:[#allocation7 + $0xb78] sm:$0xff]
    %v444 = vld [vmem:[#allocation7 + $0xb80] sm:$0xff]
    %v445 = vld [vmem:[#allocation7 + $0xb88] sm:$0xff]
    %v446 = vld [vmem:[#allocation7 + $0xb90] sm:$0xff]
    %v447 = vld [vmem:[#allocation7 + $0xb98] sm:$0xff]
    %v448 = vld [vmem:[#allocation7 + $0xba0] sm:$0xff]
    %v449 = vld [vmem:[#allocation7 + $0xba8] sm:$0xff]
    %v450 = vld [vmem:[#allocation7 + $0xbb0] sm:$0xff]
    %v451 = vld [vmem:[#allocation7 + $0xbb8] sm:$0xff]
    %v452 = vld [vmem:[#allocation7 + $0xbc0] sm:$0xff]
    %v453 = vld [vmem:[#allocation7 + $0xbc8] sm:$0xff]
    %v454 = vld [vmem:[#allocation7 + $0xbd0] sm:$0xff]
    %v455 = vld [vmem:[#allocation7 + $0xbd8] sm:$0xff]
    %v456 = vld [vmem:[#allocation7 + $0xbe0] sm:$0xff]
    %v457 = vld [vmem:[#allocation7 + $0xbe8] sm:$0xff]
    %v458 = vld [vmem:[#allocation7 + $0xbf0] sm:$0xff]
    %v459 = vld [vmem:[#allocation7 + $0xbf8] sm:$0xff]
    %v460 = vld [vmem:[#allocation9] sm:$0x3f]
    %v462 = vperm.slane %v460, 0
    %v463 = vperm.slane %v460, 1
    %v464 = vperm.slane %v460, 2
    %v465 = vperm.slane %v460, 3
    %v466 = vperm.slane %v460, 4
    %v467 = vperm.slane %v460, 5
    %v858 = vunpack.c.l.b16 %v76
    %v859 = vunpack.c.h.b16 %v76
    %v860 = vunpack.c.l.b16 %v77
    %v861 = vunpack.c.h.b16 %v77
    %v862 = vunpack.c.l.b16 %v78
    %v863 = vunpack.c.h.b16 %v78
    %v864 = vunpack.c.l.b16 %v79
    %v865 = vunpack.c.h.b16 %v79
    %v866 = vunpack.c.l.b16 %v80
    %v867 = vunpack.c.h.b16 %v80
    %v868 = vunpack.c.l.b16 %v81
    %v869 = vunpack.c.h.b16 %v81
    %v870 = vunpack.c.l.b16 %v82
    %v871 = vunpack.c.h.b16 %v82
    %v872 = vunpack.c.l.b16 %v83
    %v873 = vunpack.c.h.b16 %v83
    %v874 = vunpack.c.l.b16 %v84
    %v875 = vunpack.c.h.b16 %v84
    %v876 = vunpack.c.l.b16 %v85
    %v877 = vunpack.c.h.b16 %v85
    %v878 = vunpack.c.l.b16 %v86
    %v879 = vunpack.c.h.b16 %v86
    %v880 = vunpack.c.l.b16 %v87
    %v881 = vunpack.c.h.b16 %v87
    %v882 = vunpack.c.l.b16 %v88
    %v883 = vunpack.c.h.b16 %v88
    %v884 = vunpack.c.l.b16 %v89
    %v885 = vunpack.c.h.b16 %v89
    %v886 = vunpack.c.l.b16 %v90
    %v887 = vunpack.c.h.b16 %v90
    %v888 = vunpack.c.l.b16 %v91
    %v889 = vunpack.c.h.b16 %v91
    %v890 = vunpack.c.l.b16 %v92
    %v891 = vunpack.c.h.b16 %v92
    %v892 = vunpack.c.l.b16 %v93
    %v893 = vunpack.c.h.b16 %v93
    %v894 = vunpack.c.l.b16 %v94
    %v895 = vunpack.c.h.b16 %v94
    %v896 = vunpack.c.l.b16 %v95
    %v897 = vunpack.c.h.b16 %v95
    %v898 = vunpack.c.l.b16 %v96
    %v899 = vunpack.c.h.b16 %v96
    %v900 = vunpack.c.l.b16 %v97
    %v901 = vunpack.c.h.b16 %v97
    %v902 = vunpack.c.l.b16 %v98
    %v903 = vunpack.c.h.b16 %v98
    %v904 = vunpack.c.l.b16 %v99
    %v905 = vunpack.c.h.b16 %v99
    %v906 = vunpack.c.l.b16 %v100
    %v907 = vunpack.c.h.b16 %v100
    %v908 = vunpack.c.l.b16 %v101
    %v909 = vunpack.c.h.b16 %v101
    %v910 = vunpack.c.l.b16 %v102
    %v911 = vunpack.c.h.b16 %v102
    %v912 = vunpack.c.l.b16 %v103
    %v913 = vunpack.c.h.b16 %v103
    %v914 = vunpack.c.l.b16 %v104
    %v915 = vunpack.c.h.b16 %v104
    %v916 = vunpack.c.l.b16 %v105
    %v917 = vunpack.c.h.b16 %v105
    %v918 = vunpack.c.l.b16 %v106
    %v919 = vunpack.c.h.b16 %v106
    %v920 = vunpack.c.l.b16 %v107
    %v921 = vunpack.c.h.b16 %v107
    %v922 = vunpack.c.l.b16 %v108
    %v923 = vunpack.c.h.b16 %v108
    %v924 = vunpack.c.l.b16 %v109
    %v925 = vunpack.c.h.b16 %v109
    %v926 = vunpack.c.l.b16 %v110
    %v927 = vunpack.c.h.b16 %v110
    %v928 = vunpack.c.l.b16 %v111
    %v929 = vunpack.c.h.b16 %v111
    %v930 = vunpack.c.l.b16 %v112
    %v931 = vunpack.c.h.b16 %v112
    %v932 = vunpack.c.l.b16 %v113
    %v933 = vunpack.c.h.b16 %v113
    %v934 = vunpack.c.l.b16 %v114
    %v935 = vunpack.c.h.b16 %v114
    %v936 = vunpack.c.l.b16 %v115
    %v937 = vunpack.c.h.b16 %v115
    %v938 = vunpack.c.l.b16 %v116
    %v939 = vunpack.c.h.b16 %v116
    %v940 = vunpack.c.l.b16 %v117
    %v941 = vunpack.c.h.b16 %v117
    %v942 = vunpack.c.l.b16 %v118
    %v943 = vunpack.c.h.b16 %v118
    %v944 = vunpack.c.l.b16 %v119
    %v945 = vunpack.c.h.b16 %v119
    %v946 = vunpack.c.l.b16 %v120
    %v947 = vunpack.c.h.b16 %v120
    %v948 = vunpack.c.l.b16 %v121
    %v949 = vunpack.c.h.b16 %v121
    %v950 = vunpack.c.l.b16 %v122
    %v951 = vunpack.c.h.b16 %v122
    %v952 = vunpack.c.l.b16 %v123
    %v953 = vunpack.c.h.b16 %v123
    %v954 = vunpack.c.l.b16 %v124
    %v955 = vunpack.c.h.b16 %v124
    %v956 = vunpack.c.l.b16 %v125
    %v957 = vunpack.c.h.b16 %v125
    %v958 = vunpack.c.l.b16 %v126
    %v959 = vunpack.c.h.b16 %v126
    %v960 = vunpack.c.l.b16 %v127
    %v961 = vunpack.c.h.b16 %v127
    %v962 = vunpack.c.l.b16 %v128
    %v963 = vunpack.c.h.b16 %v128
    %v964 = vunpack.c.l.b16 %v129
    %v965 = vunpack.c.h.b16 %v129
    %v966 = vunpack.c.l.b16 %v130
    %v967 = vunpack.c.h.b16 %v130
    %v968 = vunpack.c.l.b16 %v131
    %v969 = vunpack.c.h.b16 %v131
    %v970 = vunpack.c.l.b16 %v132
    %v971 = vunpack.c.h.b16 %v132
    %v972 = vunpack.c.l.b16 %v133
    %v973 = vunpack.c.h.b16 %v133
    %v974 = vunpack.c.l.b16 %v134
    %v975 = vunpack.c.h.b16 %v134
    %v976 = vunpack.c.l.b16 %v135
    %v977 = vunpack.c.h.b16 %v135
    %v978 = vunpack.c.l.b16 %v136
    %v979 = vunpack.c.h.b16 %v136
    %v980 = vunpack.c.l.b16 %v137
    %v981 = vunpack.c.h.b16 %v137
    %v982 = vunpack.c.l.b16 %v138
    %v983 = vunpack.c.h.b16 %v138
    %v984 = vunpack.c.l.b16 %v139
    %v985 = vunpack.c.h.b16 %v139
    %v986 = vunpack.c.l.b16 %v140
    %v987 = vunpack.c.h.b16 %v140
    %v988 = vunpack.c.l.b16 %v141
    %v989 = vunpack.c.h.b16 %v141
    %v990 = vunpack.c.l.b16 %v142
    %v991 = vunpack.c.h.b16 %v142
    %v992 = vunpack.c.l.b16 %v143
    %v993 = vunpack.c.h.b16 %v143
    %v994 = vunpack.c.l.b16 %v144
    %v995 = vunpack.c.h.b16 %v144
    %v996 = vunpack.c.l.b16 %v145
    %v997 = vunpack.c.h.b16 %v145
    %v998 = vunpack.c.l.b16 %v146
    %v999 = vunpack.c.h.b16 %v146
    %v1000 = vunpack.c.l.b16 %v147
    %v1001 = vunpack.c.h.b16 %v147
    %v1002 = vunpack.c.l.b16 %v148
    %v1003 = vunpack.c.h.b16 %v148
    %v1004 = vunpack.c.l.b16 %v149
    %v1005 = vunpack.c.h.b16 %v149
    %v1006 = vunpack.c.l.b16 %v150
    %v1007 = vunpack.c.h.b16 %v150
    %v1008 = vunpack.c.l.b16 %v151
    %v1009 = vunpack.c.h.b16 %v151
    %v1010 = vunpack.c.l.b16 %v152
    %v1011 = vunpack.c.h.b16 %v152
    %v1012 = vunpack.c.l.b16 %v153
    %v1013 = vunpack.c.h.b16 %v153
    %v1014 = vunpack.c.l.b16 %v154
    %v1015 = vunpack.c.h.b16 %v154
    %v1016 = vunpack.c.l.b16 %v155
    %v1017 = vunpack.c.h.b16 %v155
    %v1018 = vunpack.c.l.b16 %v156
    %v1019 = vunpack.c.h.b16 %v156
    %v1020 = vunpack.c.l.b16 %v157
    %v1021 = vunpack.c.h.b16 %v157
    %v1022 = vunpack.c.l.b16 %v158
    %v1023 = vunpack.c.h.b16 %v158
    %v1024 = vunpack.c.l.b16 %v159
    %v1025 = vunpack.c.h.b16 %v159
    %v1026 = vunpack.c.l.b16 %v160
    %v1027 = vunpack.c.h.b16 %v160
    %v1028 = vunpack.c.l.b16 %v161
    %v1029 = vunpack.c.h.b16 %v161
    %v1030 = vunpack.c.l.b16 %v162
    %v1031 = vunpack.c.h.b16 %v162
    %v1032 = vunpack.c.l.b16 %v163
    %v1033 = vunpack.c.h.b16 %v163
    %v1034 = vunpack.c.l.b16 %v164
    %v1035 = vunpack.c.h.b16 %v164
    %v1036 = vunpack.c.l.b16 %v165
    %v1037 = vunpack.c.h.b16 %v165
    %v1038 = vunpack.c.l.b16 %v166
    %v1039 = vunpack.c.h.b16 %v166
    %v1040 = vunpack.c.l.b16 %v167
    %v1041 = vunpack.c.h.b16 %v167
    %v1042 = vunpack.c.l.b16 %v168
    %v1043 = vunpack.c.h.b16 %v168
    %v1044 = vunpack.c.l.b16 %v169
    %v1045 = vunpack.c.h.b16 %v169
    %v1046 = vunpack.c.l.b16 %v170
    %v1047 = vunpack.c.h.b16 %v170
    %v1048 = vunpack.c.l.b16 %v171
    %v1049 = vunpack.c.h.b16 %v171
    %v1050 = vunpack.c.l.b16 %v172
    %v1051 = vunpack.c.h.b16 %v172
    %v1052 = vunpack.c.l.b16 %v173
    %v1053 = vunpack.c.h.b16 %v173
    %v1054 = vunpack.c.l.b16 %v174
    %v1055 = vunpack.c.h.b16 %v174
    %v1056 = vunpack.c.l.b16 %v175
    %v1057 = vunpack.c.h.b16 %v175
    %v1058 = vunpack.c.l.b16 %v176
    %v1059 = vunpack.c.h.b16 %v176
    %v1060 = vunpack.c.l.b16 %v177
    %v1061 = vunpack.c.h.b16 %v177
    %v1062 = vunpack.c.l.b16 %v178
    %v1063 = vunpack.c.h.b16 %v178
    %v1064 = vunpack.c.l.b16 %v179
    %v1065 = vunpack.c.h.b16 %v179
    %v1066 = vunpack.c.l.b16 %v180
    %v1067 = vunpack.c.h.b16 %v180
    %v1068 = vunpack.c.l.b16 %v181
    %v1069 = vunpack.c.h.b16 %v181
    %v1070 = vunpack.c.l.b16 %v182
    %v1071 = vunpack.c.h.b16 %v182
    %v1072 = vunpack.c.l.b16 %v183
    %v1073 = vunpack.c.h.b16 %v183
    %v1074 = vunpack.c.l.b16 %v184
    %v1075 = vunpack.c.h.b16 %v184
    %v1076 = vunpack.c.l.b16 %v185
    %v1077 = vunpack.c.h.b16 %v185
    %v1078 = vunpack.c.l.b16 %v186
    %v1079 = vunpack.c.h.b16 %v186
    %v1080 = vunpack.c.l.b16 %v187
    %v1081 = vunpack.c.h.b16 %v187
    %v1082 = vunpack.c.l.b16 %v188
    %v1083 = vunpack.c.h.b16 %v188
    %v1084 = vunpack.c.l.b16 %v189
    %v1085 = vunpack.c.h.b16 %v189
    %v1086 = vunpack.c.l.b16 %v190
    %v1087 = vunpack.c.h.b16 %v190
    %v1088 = vunpack.c.l.b16 %v191
    %v1089 = vunpack.c.h.b16 %v191
    %v1090 = vunpack.c.l.b16 %v192
    %v1091 = vunpack.c.h.b16 %v192
    %v1092 = vunpack.c.l.b16 %v193
    %v1093 = vunpack.c.h.b16 %v193
    %v1094 = vunpack.c.l.b16 %v194
    %v1095 = vunpack.c.h.b16 %v194
    %v1096 = vunpack.c.l.b16 %v195
    %v1097 = vunpack.c.h.b16 %v195
    %v1098 = vunpack.c.l.b16 %v196
    %v1099 = vunpack.c.h.b16 %v196
    %v1100 = vunpack.c.l.b16 %v197
    %v1101 = vunpack.c.h.b16 %v197
    %v1102 = vunpack.c.l.b16 %v198
    %v1103 = vunpack.c.h.b16 %v198
    %v1104 = vunpack.c.l.b16 %v199
    %v1105 = vunpack.c.h.b16 %v199
    %v1106 = vunpack.c.l.b16 %v200
    %v1107 = vunpack.c.h.b16 %v200
    %v1108 = vunpack.c.l.b16 %v201
    %v1109 = vunpack.c.h.b16 %v201
    %v1110 = vunpack.c.l.b16 %v202
    %v1111 = vunpack.c.h.b16 %v202
    %v1112 = vunpack.c.l.b16 %v203
    %v1113 = vunpack.c.h.b16 %v203
    %v1114 = vunpack.c.l.b16 %v204
    %v1115 = vunpack.c.h.b16 %v204
    %v1116 = vunpack.c.l.b16 %v205
    %v1117 = vunpack.c.h.b16 %v205
    %v1118 = vunpack.c.l.b16 %v206
    %v1119 = vunpack.c.h.b16 %v206
    %v1120 = vunpack.c.l.b16 %v207
    %v1121 = vunpack.c.h.b16 %v207
    %v1122 = vunpack.c.l.b16 %v208
    %v1123 = vunpack.c.h.b16 %v208
    %v1124 = vunpack.c.l.b16 %v209
    %v1125 = vunpack.c.h.b16 %v209
    %v1126 = vunpack.c.l.b16 %v210
    %v1127 = vunpack.c.h.b16 %v210
    %v1128 = vunpack.c.l.b16 %v211
    %v1129 = vunpack.c.h.b16 %v211
    %v1130 = vunpack.c.l.b16 %v212
    %v1131 = vunpack.c.h.b16 %v212
    %v1132 = vunpack.c.l.b16 %v213
    %v1133 = vunpack.c.h.b16 %v213
    %v1134 = vunpack.c.l.b16 %v214
    %v1135 = vunpack.c.h.b16 %v214
    %v1136 = vunpack.c.l.b16 %v215
    %v1137 = vunpack.c.h.b16 %v215
    %v1138 = vunpack.c.l.b16 %v216
    %v1139 = vunpack.c.h.b16 %v216
    %v1140 = vunpack.c.l.b16 %v217
    %v1141 = vunpack.c.h.b16 %v217
    %v1142 = vunpack.c.l.b16 %v218
    %v1143 = vunpack.c.h.b16 %v218
    %v1144 = vunpack.c.l.b16 %v219
    %v1145 = vunpack.c.h.b16 %v219
    %v1146 = vunpack.c.l.b16 %v220
    %v1147 = vunpack.c.h.b16 %v220
    %v1148 = vunpack.c.l.b16 %v221
    %v1149 = vunpack.c.h.b16 %v221
    %v1150 = vunpack.c.l.b16 %v222
    %v1151 = vunpack.c.h.b16 %v222
    %v1152 = vunpack.c.l.b16 %v223
    %v1153 = vunpack.c.h.b16 %v223
    %v1154 = vunpack.c.l.b16 %v224
    %v1155 = vunpack.c.h.b16 %v224
    %v1156 = vunpack.c.l.b16 %v225
    %v1157 = vunpack.c.h.b16 %v225
    %v1158 = vunpack.c.l.b16 %v226
    %v1159 = vunpack.c.h.b16 %v226
    %v1160 = vunpack.c.l.b16 %v227
    %v1161 = vunpack.c.h.b16 %v227
    %v1162 = vunpack.c.l.b16 %v228
    %v1163 = vunpack.c.h.b16 %v228
    %v1164 = vunpack.c.l.b16 %v229
    %v1165 = vunpack.c.h.b16 %v229
    %v1166 = vunpack.c.l.b16 %v230
    %v1167 = vunpack.c.h.b16 %v230
    %v1168 = vunpack.c.l.b16 %v231
    %v1169 = vunpack.c.h.b16 %v231
    %v1170 = vunpack.c.l.b16 %v232
    %v1171 = vunpack.c.h.b16 %v232
    %v1172 = vunpack.c.l.b16 %v233
    %v1173 = vunpack.c.h.b16 %v233
    %v1174 = vunpack.c.l.b16 %v234
    %v1175 = vunpack.c.h.b16 %v234
    %v1176 = vunpack.c.l.b16 %v235
    %v1177 = vunpack.c.h.b16 %v235
    %v1178 = vunpack.c.l.b16 %v236
    %v1179 = vunpack.c.h.b16 %v236
    %v1180 = vunpack.c.l.b16 %v237
    %v1181 = vunpack.c.h.b16 %v237
    %v1182 = vunpack.c.l.b16 %v238
    %v1183 = vunpack.c.h.b16 %v238
    %v1184 = vunpack.c.l.b16 %v239
    %v1185 = vunpack.c.h.b16 %v239
    %v1186 = vunpack.c.l.b16 %v240
    %v1187 = vunpack.c.h.b16 %v240
    %v1188 = vunpack.c.l.b16 %v241
    %v1189 = vunpack.c.h.b16 %v241
    %v1190 = vunpack.c.l.b16 %v242
    %v1191 = vunpack.c.h.b16 %v242
    %v1192 = vunpack.c.l.b16 %v243
    %v1193 = vunpack.c.h.b16 %v243
    %v1194 = vunpack.c.l.b16 %v244
    %v1195 = vunpack.c.h.b16 %v244
    %v1196 = vunpack.c.l.b16 %v245
    %v1197 = vunpack.c.h.b16 %v245
    %v1198 = vunpack.c.l.b16 %v246
    %v1199 = vunpack.c.h.b16 %v246
    %v1200 = vunpack.c.l.b16 %v247
    %v1201 = vunpack.c.h.b16 %v247
    %v1202 = vunpack.c.l.b16 %v248
    %v1203 = vunpack.c.h.b16 %v248
    %v1204 = vunpack.c.l.b16 %v249
    %v1205 = vunpack.c.h.b16 %v249
    %v1206 = vunpack.c.l.b16 %v250
    %v1207 = vunpack.c.h.b16 %v250
    %v1208 = vunpack.c.l.b16 %v251
    %v1209 = vunpack.c.h.b16 %v251
    %v1210 = vunpack.c.l.b16 %v252
    %v1211 = vunpack.c.h.b16 %v252
    %v1212 = vunpack.c.l.b16 %v253
    %v1213 = vunpack.c.h.b16 %v253
    %v1214 = vunpack.c.l.b16 %v254
    %v1215 = vunpack.c.h.b16 %v254
    %v1216 = vunpack.c.l.b16 %v255
    %v1217 = vunpack.c.h.b16 %v255
    %v1218 = vunpack.c.l.b16 %v256
    %v1219 = vunpack.c.h.b16 %v256
    %v1220 = vunpack.c.l.b16 %v257
    %v1221 = vunpack.c.h.b16 %v257
    %v1222 = vunpack.c.l.b16 %v258
    %v1223 = vunpack.c.h.b16 %v258
    %v1224 = vunpack.c.l.b16 %v259
    %v1225 = vunpack.c.h.b16 %v259
    %v1226 = vunpack.c.l.b16 %v260
    %v1227 = vunpack.c.h.b16 %v260
    %v1228 = vunpack.c.l.b16 %v261
    %v1229 = vunpack.c.h.b16 %v261
    %v1230 = vunpack.c.l.b16 %v262
    %v1231 = vunpack.c.h.b16 %v262
    %v1232 = vunpack.c.l.b16 %v263
    %v1233 = vunpack.c.h.b16 %v263
    %v1234 = vunpack.c.l.b16 %v264
    %v1235 = vunpack.c.h.b16 %v264
    %v1236 = vunpack.c.l.b16 %v265
    %v1237 = vunpack.c.h.b16 %v265
    %v1238 = vunpack.c.l.b16 %v266
    %v1239 = vunpack.c.h.b16 %v266
    %v1240 = vunpack.c.l.b16 %v267
    %v1241 = vunpack.c.h.b16 %v267
    %v1242 = vunpack.c.l.b16 %v268
    %v1243 = vunpack.c.h.b16 %v268
    %v1244 = vunpack.c.l.b16 %v269
    %v1245 = vunpack.c.h.b16 %v269
    %v1246 = vunpack.c.l.b16 %v270
    %v1247 = vunpack.c.h.b16 %v270
    %v1248 = vunpack.c.l.b16 %v271
    %v1249 = vunpack.c.h.b16 %v271
    %v1250 = vunpack.c.l.b16 %v272
    %v1251 = vunpack.c.h.b16 %v272
    %v1252 = vunpack.c.l.b16 %v273
    %v1253 = vunpack.c.h.b16 %v273
    %v1254 = vunpack.c.l.b16 %v274
    %v1255 = vunpack.c.h.b16 %v274
    %v1256 = vunpack.c.l.b16 %v275
    %v1257 = vunpack.c.h.b16 %v275
    %v1258 = vunpack.c.l.b16 %v276
    %v1259 = vunpack.c.h.b16 %v276
    %v1260 = vunpack.c.l.b16 %v277
    %v1261 = vunpack.c.h.b16 %v277
    %v1262 = vunpack.c.l.b16 %v278
    %v1263 = vunpack.c.h.b16 %v278
    %v1264 = vunpack.c.l.b16 %v279
    %v1265 = vunpack.c.h.b16 %v279
    %v1266 = vunpack.c.l.b16 %v280
    %v1267 = vunpack.c.h.b16 %v280
    %v1268 = vunpack.c.l.b16 %v281
    %v1269 = vunpack.c.h.b16 %v281
    %v1270 = vunpack.c.l.b16 %v282
    %v1271 = vunpack.c.h.b16 %v282
    %v1272 = vunpack.c.l.b16 %v283
    %v1273 = vunpack.c.h.b16 %v283
    %v1274 = vunpack.c.l.b16 %v284
    %v1275 = vunpack.c.h.b16 %v284
    %v1276 = vunpack.c.l.b16 %v285
    %v1277 = vunpack.c.h.b16 %v285
    %v1278 = vunpack.c.l.b16 %v286
    %v1279 = vunpack.c.h.b16 %v286
    %v1280 = vunpack.c.l.b16 %v287
    %v1281 = vunpack.c.h.b16 %v287
    %v1282 = vunpack.c.l.b16 %v288
    %v1283 = vunpack.c.h.b16 %v288
    %v1284 = vunpack.c.l.b16 %v289
    %v1285 = vunpack.c.h.b16 %v289
    %v1286 = vunpack.c.l.b16 %v290
    %v1287 = vunpack.c.h.b16 %v290
    %v1288 = vunpack.c.l.b16 %v291
    %v1289 = vunpack.c.h.b16 %v291
    %v1290 = vunpack.c.l.b16 %v292
    %v1291 = vunpack.c.h.b16 %v292
    %v1292 = vunpack.c.l.b16 %v293
    %v1293 = vunpack.c.h.b16 %v293
    %v1294 = vunpack.c.l.b16 %v294
    %v1295 = vunpack.c.h.b16 %v294
    %v1296 = vunpack.c.l.b16 %v295
    %v1297 = vunpack.c.h.b16 %v295
    %v1298 = vunpack.c.l.b16 %v296
    %v1299 = vunpack.c.h.b16 %v296
    %v1300 = vunpack.c.l.b16 %v297
    %v1301 = vunpack.c.h.b16 %v297
    %v1302 = vunpack.c.l.b16 %v298
    %v1303 = vunpack.c.h.b16 %v298
    %v1304 = vunpack.c.l.b16 %v299
    %v1305 = vunpack.c.h.b16 %v299
    %v1306 = vunpack.c.l.b16 %v300
    %v1307 = vunpack.c.h.b16 %v300
    %v1308 = vunpack.c.l.b16 %v301
    %v1309 = vunpack.c.h.b16 %v301
    %v1310 = vunpack.c.l.b16 %v302
    %v1311 = vunpack.c.h.b16 %v302
    %v1312 = vunpack.c.l.b16 %v303
    %v1313 = vunpack.c.h.b16 %v303
    %v1314 = vunpack.c.l.b16 %v304
    %v1315 = vunpack.c.h.b16 %v304
    %v1316 = vunpack.c.l.b16 %v305
    %v1317 = vunpack.c.h.b16 %v305
    %v1318 = vunpack.c.l.b16 %v306
    %v1319 = vunpack.c.h.b16 %v306
    %v1320 = vunpack.c.l.b16 %v307
    %v1321 = vunpack.c.h.b16 %v307
    %v1322 = vunpack.c.l.b16 %v308
    %v1323 = vunpack.c.h.b16 %v308
    %v1324 = vunpack.c.l.b16 %v309
    %v1325 = vunpack.c.h.b16 %v309
    %v1326 = vunpack.c.l.b16 %v310
    %v1327 = vunpack.c.h.b16 %v310
    %v1328 = vunpack.c.l.b16 %v311
    %v1329 = vunpack.c.h.b16 %v311
    %v1330 = vunpack.c.l.b16 %v312
    %v1331 = vunpack.c.h.b16 %v312
    %v1332 = vunpack.c.l.b16 %v313
    %v1333 = vunpack.c.h.b16 %v313
    %v1334 = vunpack.c.l.b16 %v314
    %v1335 = vunpack.c.h.b16 %v314
    %v1336 = vunpack.c.l.b16 %v315
    %v1337 = vunpack.c.h.b16 %v315
    %v1338 = vunpack.c.l.b16 %v316
    %v1339 = vunpack.c.h.b16 %v316
    %v1340 = vunpack.c.l.b16 %v317
    %v1341 = vunpack.c.h.b16 %v317
    %v1342 = vunpack.c.l.b16 %v318
    %v1343 = vunpack.c.h.b16 %v318
    %v1344 = vunpack.c.l.b16 %v319
    %v1345 = vunpack.c.h.b16 %v319
    %v1346 = vunpack.c.l.b16 %v320
    %v1347 = vunpack.c.h.b16 %v320
    %v1348 = vunpack.c.l.b16 %v321
    %v1349 = vunpack.c.h.b16 %v321
    %v1350 = vunpack.c.l.b16 %v322
    %v1351 = vunpack.c.h.b16 %v322
    %v1352 = vunpack.c.l.b16 %v323
    %v1353 = vunpack.c.h.b16 %v323
    %v1354 = vunpack.c.l.b16 %v324
    %v1355 = vunpack.c.h.b16 %v324
    %v1356 = vunpack.c.l.b16 %v325
    %v1357 = vunpack.c.h.b16 %v325
    %v1358 = vunpack.c.l.b16 %v326
    %v1359 = vunpack.c.h.b16 %v326
    %v1360 = vunpack.c.l.b16 %v327
    %v1361 = vunpack.c.h.b16 %v327
    %v1362 = vunpack.c.l.b16 %v328
    %v1363 = vunpack.c.h.b16 %v328
    %v1364 = vunpack.c.l.b16 %v329
    %v1365 = vunpack.c.h.b16 %v329
    %v1366 = vunpack.c.l.b16 %v330
    %v1367 = vunpack.c.h.b16 %v330
    %v1368 = vunpack.c.l.b16 %v331
    %v1369 = vunpack.c.h.b16 %v331
    %v1370 = vunpack.c.l.b16 %v332
    %v1371 = vunpack.c.h.b16 %v332
    %v1372 = vunpack.c.l.b16 %v333
    %v1373 = vunpack.c.h.b16 %v333
    %v1374 = vunpack.c.l.b16 %v334
    %v1375 = vunpack.c.h.b16 %v334
    %v1376 = vunpack.c.l.b16 %v335
    %v1377 = vunpack.c.h.b16 %v335
    %v1378 = vunpack.c.l.b16 %v336
    %v1379 = vunpack.c.h.b16 %v336
    %v1380 = vunpack.c.l.b16 %v337
    %v1381 = vunpack.c.h.b16 %v337
    %v1382 = vunpack.c.l.b16 %v338
    %v1383 = vunpack.c.h.b16 %v338
    %v1384 = vunpack.c.l.b16 %v339
    %v1385 = vunpack.c.h.b16 %v339
    %v1386 = vunpack.c.l.b16 %v340
    %v1387 = vunpack.c.h.b16 %v340
    %v1388 = vunpack.c.l.b16 %v341
    %v1389 = vunpack.c.h.b16 %v341
    %v1390 = vunpack.c.l.b16 %v342
    %v1391 = vunpack.c.h.b16 %v342
    %v1392 = vunpack.c.l.b16 %v343
    %v1393 = vunpack.c.h.b16 %v343
    %v1394 = vunpack.c.l.b16 %v344
    %v1395 = vunpack.c.h.b16 %v344
    %v1396 = vunpack.c.l.b16 %v345
    %v1397 = vunpack.c.h.b16 %v345
    %v1398 = vunpack.c.l.b16 %v346
    %v1399 = vunpack.c.h.b16 %v346
    %v1400 = vunpack.c.l.b16 %v347
    %v1401 = vunpack.c.h.b16 %v347
    %v1402 = vunpack.c.l.b16 %v348
    %v1403 = vunpack.c.h.b16 %v348
    %v1404 = vunpack.c.l.b16 %v349
    %v1405 = vunpack.c.h.b16 %v349
    %v1406 = vunpack.c.l.b16 %v350
    %v1407 = vunpack.c.h.b16 %v350
    %v1408 = vunpack.c.l.b16 %v351
    %v1409 = vunpack.c.h.b16 %v351
    %v1410 = vunpack.c.l.b16 %v352
    %v1411 = vunpack.c.h.b16 %v352
    %v1412 = vunpack.c.l.b16 %v353
    %v1413 = vunpack.c.h.b16 %v353
    %v1414 = vunpack.c.l.b16 %v354
    %v1415 = vunpack.c.h.b16 %v354
    %v1416 = vunpack.c.l.b16 %v355
    %v1417 = vunpack.c.h.b16 %v355
    %v1418 = vunpack.c.l.b16 %v356
    %v1419 = vunpack.c.h.b16 %v356
    %v1420 = vunpack.c.l.b16 %v357
    %v1421 = vunpack.c.h.b16 %v357
    %v1422 = vunpack.c.l.b16 %v358
    %v1423 = vunpack.c.h.b16 %v358
    %v1424 = vunpack.c.l.b16 %v359
    %v1425 = vunpack.c.h.b16 %v359
    %v1426 = vunpack.c.l.b16 %v360
    %v1427 = vunpack.c.h.b16 %v360
    %v1428 = vunpack.c.l.b16 %v361
    %v1429 = vunpack.c.h.b16 %v361
    %v1430 = vunpack.c.l.b16 %v362
    %v1431 = vunpack.c.h.b16 %v362
    %v1432 = vunpack.c.l.b16 %v363
    %v1433 = vunpack.c.h.b16 %v363
    %v1434 = vunpack.c.l.b16 %v364
    %v1435 = vunpack.c.h.b16 %v364
    %v1436 = vunpack.c.l.b16 %v365
    %v1437 = vunpack.c.h.b16 %v365
    %v1438 = vunpack.c.l.b16 %v366
    %v1439 = vunpack.c.h.b16 %v366
    %v1440 = vunpack.c.l.b16 %v367
    %v1441 = vunpack.c.h.b16 %v367
    %v1442 = vunpack.c.l.b16 %v368
    %v1443 = vunpack.c.h.b16 %v368
    %v1444 = vunpack.c.l.b16 %v369
    %v1445 = vunpack.c.h.b16 %v369
    %v1446 = vunpack.c.l.b16 %v370
    %v1447 = vunpack.c.h.b16 %v370
    %v1448 = vunpack.c.l.b16 %v371
    %v1449 = vunpack.c.h.b16 %v371
    %v1450 = vunpack.c.l.b16 %v372
    %v1451 = vunpack.c.h.b16 %v372
    %v1452 = vunpack.c.l.b16 %v373
    %v1453 = vunpack.c.h.b16 %v373
    %v1454 = vunpack.c.l.b16 %v374
    %v1455 = vunpack.c.h.b16 %v374
    %v1456 = vunpack.c.l.b16 %v375
    %v1457 = vunpack.c.h.b16 %v375
    %v1458 = vunpack.c.l.b16 %v376
    %v1459 = vunpack.c.h.b16 %v376
    %v1460 = vunpack.c.l.b16 %v377
    %v1461 = vunpack.c.h.b16 %v377
    %v1462 = vunpack.c.l.b16 %v378
    %v1463 = vunpack.c.h.b16 %v378
    %v1464 = vunpack.c.l.b16 %v379
    %v1465 = vunpack.c.h.b16 %v379
    %v1466 = vunpack.c.l.b16 %v380
    %v1467 = vunpack.c.h.b16 %v380
    %v1468 = vunpack.c.l.b16 %v381
    %v1469 = vunpack.c.h.b16 %v381
    %v1470 = vunpack.c.l.b16 %v382
    %v1471 = vunpack.c.h.b16 %v382
    %v1472 = vunpack.c.l.b16 %v383
    %v1473 = vunpack.c.h.b16 %v383
    %v1474 = vunpack.c.l.b16 %v384
    %v1475 = vunpack.c.h.b16 %v384
    %v1476 = vunpack.c.l.b16 %v385
    %v1477 = vunpack.c.h.b16 %v385
    %v1478 = vunpack.c.l.b16 %v386
    %v1479 = vunpack.c.h.b16 %v386
    %v1480 = vunpack.c.l.b16 %v387
    %v1481 = vunpack.c.h.b16 %v387
    %v1482 = vunpack.c.l.b16 %v388
    %v1483 = vunpack.c.h.b16 %v388
    %v1484 = vunpack.c.l.b16 %v389
    %v1485 = vunpack.c.h.b16 %v389
    %v1486 = vunpack.c.l.b16 %v390
    %v1487 = vunpack.c.h.b16 %v390
    %v1488 = vunpack.c.l.b16 %v391
    %v1489 = vunpack.c.h.b16 %v391
    %v1490 = vunpack.c.l.b16 %v392
    %v1491 = vunpack.c.h.b16 %v392
    %v1492 = vunpack.c.l.b16 %v393
    %v1493 = vunpack.c.h.b16 %v393
    %v1494 = vunpack.c.l.b16 %v394
    %v1495 = vunpack.c.h.b16 %v394
    %v1496 = vunpack.c.l.b16 %v395
    %v1497 = vunpack.c.h.b16 %v395
    %v1498 = vunpack.c.l.b16 %v396
    %v1499 = vunpack.c.h.b16 %v396
    %v1500 = vunpack.c.l.b16 %v397
    %v1501 = vunpack.c.h.b16 %v397
    %v1502 = vunpack.c.l.b16 %v398
    %v1503 = vunpack.c.h.b16 %v398
    %v1504 = vunpack.c.l.b16 %v399
    %v1505 = vunpack.c.h.b16 %v399
    %v1506 = vunpack.c.l.b16 %v400
    %v1507 = vunpack.c.h.b16 %v400
    %v1508 = vunpack.c.l.b16 %v401
    %v1509 = vunpack.c.h.b16 %v401
    %v1510 = vunpack.c.l.b16 %v402
    %v1511 = vunpack.c.h.b16 %v402
    %v1512 = vunpack.c.l.b16 %v403
    %v1513 = vunpack.c.h.b16 %v403
    %v1514 = vunpack.c.l.b16 %v404
    %v1515 = vunpack.c.h.b16 %v404
    %v1516 = vunpack.c.l.b16 %v405
    %v1517 = vunpack.c.h.b16 %v405
    %v1518 = vunpack.c.l.b16 %v406
    %v1519 = vunpack.c.h.b16 %v406
    %v1520 = vunpack.c.l.b16 %v407
    %v1521 = vunpack.c.h.b16 %v407
    %v1522 = vunpack.c.l.b16 %v408
    %v1523 = vunpack.c.h.b16 %v408
    %v1524 = vunpack.c.l.b16 %v409
    %v1525 = vunpack.c.h.b16 %v409
    %v1526 = vunpack.c.l.b16 %v410
    %v1527 = vunpack.c.h.b16 %v410
    %v1528 = vunpack.c.l.b16 %v411
    %v1529 = vunpack.c.h.b16 %v411
    %v1530 = vunpack.c.l.b16 %v412
    %v1531 = vunpack.c.h.b16 %v412
    %v1532 = vunpack.c.l.b16 %v413
    %v1533 = vunpack.c.h.b16 %v413
    %v1534 = vunpack.c.l.b16 %v414
    %v1535 = vunpack.c.h.b16 %v414
    %v1536 = vunpack.c.l.b16 %v415
    %v1537 = vunpack.c.h.b16 %v415
    %v1538 = vunpack.c.l.b16 %v416
    %v1539 = vunpack.c.h.b16 %v416
    %v1540 = vunpack.c.l.b16 %v417
    %v1541 = vunpack.c.h.b16 %v417
    %v1542 = vunpack.c.l.b16 %v418
    %v1543 = vunpack.c.h.b16 %v418
    %v1544 = vunpack.c.l.b16 %v419
    %v1545 = vunpack.c.h.b16 %v419
    %v1546 = vunpack.c.l.b16 %v420
    %v1547 = vunpack.c.h.b16 %v420
    %v1548 = vunpack.c.l.b16 %v421
    %v1549 = vunpack.c.h.b16 %v421
    %v1550 = vunpack.c.l.b16 %v422
    %v1551 = vunpack.c.h.b16 %v422
    %v1552 = vunpack.c.l.b16 %v423
    %v1553 = vunpack.c.h.b16 %v423
    %v1554 = vunpack.c.l.b16 %v424
    %v1555 = vunpack.c.h.b16 %v424
    %v1556 = vunpack.c.l.b16 %v425
    %v1557 = vunpack.c.h.b16 %v425
    %v1558 = vunpack.c.l.b16 %v426
    %v1559 = vunpack.c.h.b16 %v426
    %v1560 = vunpack.c.l.b16 %v427
    %v1561 = vunpack.c.h.b16 %v427
    %v1562 = vunpack.c.l.b16 %v428
    %v1563 = vunpack.c.h.b16 %v428
    %v1564 = vunpack.c.l.b16 %v429
    %v1565 = vunpack.c.h.b16 %v429
    %v1566 = vunpack.c.l.b16 %v430
    %v1567 = vunpack.c.h.b16 %v430
    %v1568 = vunpack.c.l.b16 %v431
    %v1569 = vunpack.c.h.b16 %v431
    %v1570 = vunpack.c.l.b16 %v432
    %v1571 = vunpack.c.h.b16 %v432
    %v1572 = vunpack.c.l.b16 %v433
    %v1573 = vunpack.c.h.b16 %v433
    %v1574 = vunpack.c.l.b16 %v434
    %v1575 = vunpack.c.h.b16 %v434
    %v1576 = vunpack.c.l.b16 %v435
    %v1577 = vunpack.c.h.b16 %v435
    %v1578 = vunpack.c.l.b16 %v436
    %v1579 = vunpack.c.h.b16 %v436
    %v1580 = vunpack.c.l.b16 %v437
    %v1581 = vunpack.c.h.b16 %v437
    %v1582 = vunpack.c.l.b16 %v438
    %v1583 = vunpack.c.h.b16 %v438
    %v1584 = vunpack.c.l.b16 %v439
    %v1585 = vunpack.c.h.b16 %v439
    %v1586 = vunpack.c.l.b16 %v440
    %v1587 = vunpack.c.h.b16 %v440
    %v1588 = vunpack.c.l.b16 %v441
    %v1589 = vunpack.c.h.b16 %v441
    %v1590 = vunpack.c.l.b16 %v442
    %v1591 = vunpack.c.h.b16 %v442
    %v1592 = vunpack.c.l.b16 %v443
    %v1593 = vunpack.c.h.b16 %v443
    %v1594 = vunpack.c.l.b16 %v444
    %v1595 = vunpack.c.h.b16 %v444
    %v1596 = vunpack.c.l.b16 %v445
    %v1597 = vunpack.c.h.b16 %v445
    %v1598 = vunpack.c.l.b16 %v446
    %v1599 = vunpack.c.h.b16 %v446
    %v1600 = vunpack.c.l.b16 %v447
    %v1601 = vunpack.c.h.b16 %v447
    %v1602 = vunpack.c.l.b16 %v448
    %v1603 = vunpack.c.h.b16 %v448
    %v1604 = vunpack.c.l.b16 %v449
    %v1605 = vunpack.c.h.b16 %v449
    %v1606 = vunpack.c.l.b16 %v450
    %v1607 = vunpack.c.h.b16 %v450
    %v1608 = vunpack.c.l.b16 %v451
    %v1609 = vunpack.c.h.b16 %v451
    %v1610 = vunpack.c.l.b16 %v452
    %v1611 = vunpack.c.h.b16 %v452
    %v1612 = vunpack.c.l.b16 %v453
    %v1613 = vunpack.c.h.b16 %v453
    %v1614 = vunpack.c.l.b16 %v454
    %v1615 = vunpack.c.h.b16 %v454
    %v1616 = vunpack.c.l.b16 %v455
    %v1617 = vunpack.c.h.b16 %v455
    %v1618 = vunpack.c.l.b16 %v456
    %v1619 = vunpack.c.h.b16 %v456
    %v1620 = vunpack.c.l.b16 %v457
    %v1621 = vunpack.c.h.b16 %v457
    %v1622 = vunpack.c.l.b16 %v458
    %v1623 = vunpack.c.h.b16 %v458
    %v1624 = vunpack.c.l.b16 %v459
    %v1625 = vunpack.c.h.b16 %v459
    %v1626 = vpack.c.b16 %v864, %v858
    %v1627 = vpack.c.b16 %v865, %v859
    %v1628 = vpack.c.b16 %v866, %v860
    %v1629 = vpack.c.b16 %v867, %v861
    %v1630 = vpack.c.b16 %v868, %v862
    %v1631 = vpack.c.b16 %v869, %v863
    %v1632 = vpack.c.b16 %v876, %v870
    %v1633 = vpack.c.b16 %v877, %v871
    %v1634 = vpack.c.b16 %v878, %v872
    %v1635 = vpack.c.b16 %v879, %v873
    %v1636 = vpack.c.b16 %v880, %v874
    %v1637 = vpack.c.b16 %v881, %v875
    %v1638 = vpack.c.b16 %v888, %v882
    %v1639 = vpack.c.b16 %v889, %v883
    %v1640 = vpack.c.b16 %v890, %v884
    %v1641 = vpack.c.b16 %v891, %v885
    %v1642 = vpack.c.b16 %v892, %v886
    %v1643 = vpack.c.b16 %v893, %v887
    %v1644 = vpack.c.b16 %v900, %v894
    %v1645 = vpack.c.b16 %v901, %v895
    %v1646 = vpack.c.b16 %v902, %v896
    %v1647 = vpack.c.b16 %v903, %v897
    %v1648 = vpack.c.b16 %v904, %v898
    %v1649 = vpack.c.b16 %v905, %v899
    %v1650 = vpack.c.b16 %v912, %v906
    %v1651 = vpack.c.b16 %v913, %v907
    %v1652 = vpack.c.b16 %v914, %v908
    %v1653 = vpack.c.b16 %v915, %v909
    %v1654 = vpack.c.b16 %v916, %v910
    %v1655 = vpack.c.b16 %v917, %v911
    %v1656 = vpack.c.b16 %v924, %v918
    %v1657 = vpack.c.b16 %v925, %v919
    %v1658 = vpack.c.b16 %v926, %v920
    %v1659 = vpack.c.b16 %v927, %v921
    %v1660 = vpack.c.b16 %v928, %v922
    %v1661 = vpack.c.b16 %v929, %v923
    %v1662 = vpack.c.b16 %v936, %v930
    %v1663 = vpack.c.b16 %v937, %v931
    %v1664 = vpack.c.b16 %v938, %v932
    %v1665 = vpack.c.b16 %v939, %v933
    %v1666 = vpack.c.b16 %v940, %v934
    %v1667 = vpack.c.b16 %v941, %v935
    %v1668 = vpack.c.b16 %v948, %v942
    %v1669 = vpack.c.b16 %v949, %v943
    %v1670 = vpack.c.b16 %v950, %v944
    %v1671 = vpack.c.b16 %v951, %v945
    %v1672 = vpack.c.b16 %v952, %v946
    %v1673 = vpack.c.b16 %v953, %v947
    %v1674 = vpack.c.b16 %v960, %v954
    %v1675 = vpack.c.b16 %v961, %v955
    %v1676 = vpack.c.b16 %v962, %v956
    %v1677 = vpack.c.b16 %v963, %v957
    %v1678 = vpack.c.b16 %v964, %v958
    %v1679 = vpack.c.b16 %v965, %v959
    %v1680 = vpack.c.b16 %v972, %v966
    %v1681 = vpack.c.b16 %v973, %v967
    %v1682 = vpack.c.b16 %v974, %v968
    %v1683 = vpack.c.b16 %v975, %v969
    %v1684 = vpack.c.b16 %v976, %v970
    %v1685 = vpack.c.b16 %v977, %v971
    %v1686 = vpack.c.b16 %v984, %v978
    %v1687 = vpack.c.b16 %v985, %v979
    %v1688 = vpack.c.b16 %v986, %v980
    %v1689 = vpack.c.b16 %v987, %v981
    %v1690 = vpack.c.b16 %v988, %v982
    %v1691 = vpack.c.b16 %v989, %v983
    %v1692 = vpack.c.b16 %v996, %v990
    %v1693 = vpack.c.b16 %v997, %v991
    %v1694 = vpack.c.b16 %v998, %v992
    %v1695 = vpack.c.b16 %v999, %v993
    %v1696 = vpack.c.b16 %v1000, %v994
    %v1697 = vpack.c.b16 %v1001, %v995
    %v1698 = vpack.c.b16 %v1008, %v1002
    %v1699 = vpack.c.b16 %v1009, %v1003
    %v1700 = vpack.c.b16 %v1010, %v1004
    %v1701 = vpack.c.b16 %v1011, %v1005
    %v1702 = vpack.c.b16 %v1012, %v1006
    %v1703 = vpack.c.b16 %v1013, %v1007
    %v1704 = vpack.c.b16 %v1020, %v1014
    %v1705 = vpack.c.b16 %v1021, %v1015
    %v1706 = vpack.c.b16 %v1022, %v1016
    %v1707 = vpack.c.b16 %v1023, %v1017
    %v1708 = vpack.c.b16 %v1024, %v1018
    %v1709 = vpack.c.b16 %v1025, %v1019
    %v1710 = vpack.c.b16 %v1032, %v1026
    %v1711 = vpack.c.b16 %v1033, %v1027
    %v1712 = vpack.c.b16 %v1034, %v1028
    %v1713 = vpack.c.b16 %v1035, %v1029
    %v1714 = vpack.c.b16 %v1036, %v1030
    %v1715 = vpack.c.b16 %v1037, %v1031
    %v1716 = vpack.c.b16 %v1044, %v1038
    %v1717 = vpack.c.b16 %v1045, %v1039
    %v1718 = vpack.c.b16 %v1046, %v1040
    %v1719 = vpack.c.b16 %v1047, %v1041
    %v1720 = vpack.c.b16 %v1048, %v1042
    %v1721 = vpack.c.b16 %v1049, %v1043
    %v1722 = vpack.c.b16 %v1056, %v1050
    %v1723 = vpack.c.b16 %v1057, %v1051
    %v1724 = vpack.c.b16 %v1058, %v1052
    %v1725 = vpack.c.b16 %v1059, %v1053
    %v1726 = vpack.c.b16 %v1060, %v1054
    %v1727 = vpack.c.b16 %v1061, %v1055
    %v1728 = vpack.c.b16 %v1068, %v1062
    %v1729 = vpack.c.b16 %v1069, %v1063
    %v1730 = vpack.c.b16 %v1070, %v1064
    %v1731 = vpack.c.b16 %v1071, %v1065
    %v1732 = vpack.c.b16 %v1072, %v1066
    %v1733 = vpack.c.b16 %v1073, %v1067
    %v1734 = vpack.c.b16 %v1080, %v1074
    %v1735 = vpack.c.b16 %v1081, %v1075
    %v1736 = vpack.c.b16 %v1082, %v1076
    %v1737 = vpack.c.b16 %v1083, %v1077
    %v1738 = vpack.c.b16 %v1084, %v1078
    %v1739 = vpack.c.b16 %v1085, %v1079
    %v1740 = vpack.c.b16 %v1092, %v1086
    %v1741 = vpack.c.b16 %v1093, %v1087
    %v1742 = vpack.c.b16 %v1094, %v1088
    %v1743 = vpack.c.b16 %v1095, %v1089
    %v1744 = vpack.c.b16 %v1096, %v1090
    %v1745 = vpack.c.b16 %v1097, %v1091
    %v1746 = vpack.c.b16 %v1104, %v1098
    %v1747 = vpack.c.b16 %v1105, %v1099
    %v1748 = vpack.c.b16 %v1106, %v1100
    %v1749 = vpack.c.b16 %v1107, %v1101
    %v1750 = vpack.c.b16 %v1108, %v1102
    %v1751 = vpack.c.b16 %v1109, %v1103
    %v1752 = vpack.c.b16 %v1116, %v1110
    %v1753 = vpack.c.b16 %v1117, %v1111
    %v1754 = vpack.c.b16 %v1118, %v1112
    %v1755 = vpack.c.b16 %v1119, %v1113
    %v1756 = vpack.c.b16 %v1120, %v1114
    %v1757 = vpack.c.b16 %v1121, %v1115
    %v1758 = vpack.c.b16 %v1128, %v1122
    %v1759 = vpack.c.b16 %v1129, %v1123
    %v1760 = vpack.c.b16 %v1130, %v1124
    %v1761 = vpack.c.b16 %v1131, %v1125
    %v1762 = vpack.c.b16 %v1132, %v1126
    %v1763 = vpack.c.b16 %v1133, %v1127
    %v1764 = vpack.c.b16 %v1140, %v1134
    %v1765 = vpack.c.b16 %v1141, %v1135
    %v1766 = vpack.c.b16 %v1142, %v1136
    %v1767 = vpack.c.b16 %v1143, %v1137
    %v1768 = vpack.c.b16 %v1144, %v1138
    %v1769 = vpack.c.b16 %v1145, %v1139
    %v1770 = vpack.c.b16 %v1152, %v1146
    %v1771 = vpack.c.b16 %v1153, %v1147
    %v1772 = vpack.c.b16 %v1154, %v1148
    %v1773 = vpack.c.b16 %v1155, %v1149
    %v1774 = vpack.c.b16 %v1156, %v1150
    %v1775 = vpack.c.b16 %v1157, %v1151
    %v1776 = vpack.c.b16 %v1164, %v1158
    %v1777 = vpack.c.b16 %v1165, %v1159
    %v1778 = vpack.c.b16 %v1166, %v1160
    %v1779 = vpack.c.b16 %v1167, %v1161
    %v1780 = vpack.c.b16 %v1168, %v1162
    %v1781 = vpack.c.b16 %v1169, %v1163
    %v1782 = vpack.c.b16 %v1176, %v1170
    %v1783 = vpack.c.b16 %v1177, %v1171
    %v1784 = vpack.c.b16 %v1178, %v1172
    %v1785 = vpack.c.b16 %v1179, %v1173
    %v1786 = vpack.c.b16 %v1180, %v1174
    %v1787 = vpack.c.b16 %v1181, %v1175
    %v1788 = vpack.c.b16 %v1188, %v1182
    %v1789 = vpack.c.b16 %v1189, %v1183
    %v1790 = vpack.c.b16 %v1190, %v1184
    %v1791 = vpack.c.b16 %v1191, %v1185
    %v1792 = vpack.c.b16 %v1192, %v1186
    %v1793 = vpack.c.b16 %v1193, %v1187
    %v1794 = vpack.c.b16 %v1200, %v1194
    %v1795 = vpack.c.b16 %v1201, %v1195
    %v1796 = vpack.c.b16 %v1202, %v1196
    %v1797 = vpack.c.b16 %v1203, %v1197
    %v1798 = vpack.c.b16 %v1204, %v1198
    %v1799 = vpack.c.b16 %v1205, %v1199
    %v1800 = vpack.c.b16 %v1212, %v1206
    %v1801 = vpack.c.b16 %v1213, %v1207
    %v1802 = vpack.c.b16 %v1214, %v1208
    %v1803 = vpack.c.b16 %v1215, %v1209
    %v1804 = vpack.c.b16 %v1216, %v1210
    %v1805 = vpack.c.b16 %v1217, %v1211
    %v1806 = vpack.c.b16 %v1224, %v1218
    %v1807 = vpack.c.b16 %v1225, %v1219
    %v1808 = vpack.c.b16 %v1226, %v1220
    %v1809 = vpack.c.b16 %v1227, %v1221
    %v1810 = vpack.c.b16 %v1228, %v1222
    %v1811 = vpack.c.b16 %v1229, %v1223
    %v1812 = vpack.c.b16 %v1236, %v1230
    %v1813 = vpack.c.b16 %v1237, %v1231
    %v1814 = vpack.c.b16 %v1238, %v1232
    %v1815 = vpack.c.b16 %v1239, %v1233
    %v1816 = vpack.c.b16 %v1240, %v1234
    %v1817 = vpack.c.b16 %v1241, %v1235
    %v1818 = vpack.c.b16 %v1248, %v1242
    %v1819 = vpack.c.b16 %v1249, %v1243
    %v1820 = vpack.c.b16 %v1250, %v1244
    %v1821 = vpack.c.b16 %v1251, %v1245
    %v1822 = vpack.c.b16 %v1252, %v1246
    %v1823 = vpack.c.b16 %v1253, %v1247
    %v1824 = vpack.c.b16 %v1260, %v1254
    %v1825 = vpack.c.b16 %v1261, %v1255
    %v1826 = vpack.c.b16 %v1262, %v1256
    %v1827 = vpack.c.b16 %v1263, %v1257
    %v1828 = vpack.c.b16 %v1264, %v1258
    %v1829 = vpack.c.b16 %v1265, %v1259
    %v1830 = vpack.c.b16 %v1272, %v1266
    %v1831 = vpack.c.b16 %v1273, %v1267
    %v1832 = vpack.c.b16 %v1274, %v1268
    %v1833 = vpack.c.b16 %v1275, %v1269
    %v1834 = vpack.c.b16 %v1276, %v1270
    %v1835 = vpack.c.b16 %v1277, %v1271
    %v1836 = vpack.c.b16 %v1284, %v1278
    %v1837 = vpack.c.b16 %v1285, %v1279
    %v1838 = vpack.c.b16 %v1286, %v1280
    %v1839 = vpack.c.b16 %v1287, %v1281
    %v1840 = vpack.c.b16 %v1288, %v1282
    %v1841 = vpack.c.b16 %v1289, %v1283
    %v1842 = vpack.c.b16 %v1296, %v1290
    %v1843 = vpack.c.b16 %v1297, %v1291
    %v1844 = vpack.c.b16 %v1298, %v1292
    %v1845 = vpack.c.b16 %v1299, %v1293
    %v1846 = vpack.c.b16 %v1300, %v1294
    %v1847 = vpack.c.b16 %v1301, %v1295
    %v1848 = vpack.c.b16 %v1308, %v1302
    %v1849 = vpack.c.b16 %v1309, %v1303
    %v1850 = vpack.c.b16 %v1310, %v1304
    %v1851 = vpack.c.b16 %v1311, %v1305
    %v1852 = vpack.c.b16 %v1312, %v1306
    %v1853 = vpack.c.b16 %v1313, %v1307
    %v1854 = vpack.c.b16 %v1320, %v1314
    %v1855 = vpack.c.b16 %v1321, %v1315
    %v1856 = vpack.c.b16 %v1322, %v1316
    %v1857 = vpack.c.b16 %v1323, %v1317
    %v1858 = vpack.c.b16 %v1324, %v1318
    %v1859 = vpack.c.b16 %v1325, %v1319
    %v1860 = vpack.c.b16 %v1332, %v1326
    %v1861 = vpack.c.b16 %v1333, %v1327
    %v1862 = vpack.c.b16 %v1334, %v1328
    %v1863 = vpack.c.b16 %v1335, %v1329
    %v1864 = vpack.c.b16 %v1336, %v1330
    %v1865 = vpack.c.b16 %v1337, %v1331
    %v1866 = vpack.c.b16 %v1344, %v1338
    %v1867 = vpack.c.b16 %v1345, %v1339
    %v1868 = vpack.c.b16 %v1346, %v1340
    %v1869 = vpack.c.b16 %v1347, %v1341
    %v1870 = vpack.c.b16 %v1348, %v1342
    %v1871 = vpack.c.b16 %v1349, %v1343
    %v1872 = vpack.c.b16 %v1356, %v1350
    %v1873 = vpack.c.b16 %v1357, %v1351
    %v1874 = vpack.c.b16 %v1358, %v1352
    %v1875 = vpack.c.b16 %v1359, %v1353
    %v1876 = vpack.c.b16 %v1360, %v1354
    %v1877 = vpack.c.b16 %v1361, %v1355
    %v1878 = vpack.c.b16 %v1368, %v1362
    %v1879 = vpack.c.b16 %v1369, %v1363
    %v1880 = vpack.c.b16 %v1370, %v1364
    %v1881 = vpack.c.b16 %v1371, %v1365
    %v1882 = vpack.c.b16 %v1372, %v1366
    %v1883 = vpack.c.b16 %v1373, %v1367
    %v1884 = vpack.c.b16 %v1380, %v1374
    %v1885 = vpack.c.b16 %v1381, %v1375
    %v1886 = vpack.c.b16 %v1382, %v1376
    %v1887 = vpack.c.b16 %v1383, %v1377
    %v1888 = vpack.c.b16 %v1384, %v1378
    %v1889 = vpack.c.b16 %v1385, %v1379
    %v1890 = vpack.c.b16 %v1392, %v1386
    %v1891 = vpack.c.b16 %v1393, %v1387
    %v1892 = vpack.c.b16 %v1394, %v1388
    %v1893 = vpack.c.b16 %v1395, %v1389
    %v1894 = vpack.c.b16 %v1396, %v1390
    %v1895 = vpack.c.b16 %v1397, %v1391
    %v1896 = vpack.c.b16 %v1404, %v1398
    %v1897 = vpack.c.b16 %v1405, %v1399
    %v1898 = vpack.c.b16 %v1406, %v1400
    %v1899 = vpack.c.b16 %v1407, %v1401
    %v1900 = vpack.c.b16 %v1408, %v1402
    %v1901 = vpack.c.b16 %v1409, %v1403
    %v1902 = vpack.c.b16 %v1416, %v1410
    %v1903 = vpack.c.b16 %v1417, %v1411
    %v1904 = vpack.c.b16 %v1418, %v1412
    %v1905 = vpack.c.b16 %v1419, %v1413
    %v1906 = vpack.c.b16 %v1420, %v1414
    %v1907 = vpack.c.b16 %v1421, %v1415
    %v1908 = vpack.c.b16 %v1428, %v1422
    %v1909 = vpack.c.b16 %v1429, %v1423
    %v1910 = vpack.c.b16 %v1430, %v1424
    %v1911 = vpack.c.b16 %v1431, %v1425
    %v1912 = vpack.c.b16 %v1432, %v1426
    %v1913 = vpack.c.b16 %v1433, %v1427
    %v1914 = vpack.c.b16 %v1440, %v1434
    %v1915 = vpack.c.b16 %v1441, %v1435
    %v1916 = vpack.c.b16 %v1442, %v1436
    %v1917 = vpack.c.b16 %v1443, %v1437
    %v1918 = vpack.c.b16 %v1444, %v1438
    %v1919 = vpack.c.b16 %v1445, %v1439
    %v1920 = vpack.c.b16 %v1452, %v1446
    %v1921 = vpack.c.b16 %v1453, %v1447
    %v1922 = vpack.c.b16 %v1454, %v1448
    %v1923 = vpack.c.b16 %v1455, %v1449
    %v1924 = vpack.c.b16 %v1456, %v1450
    %v1925 = vpack.c.b16 %v1457, %v1451
    %v1926 = vpack.c.b16 %v1464, %v1458
    %v1927 = vpack.c.b16 %v1465, %v1459
    %v1928 = vpack.c.b16 %v1466, %v1460
    %v1929 = vpack.c.b16 %v1467, %v1461
    %v1930 = vpack.c.b16 %v1468, %v1462
    %v1931 = vpack.c.b16 %v1469, %v1463
    %v1932 = vpack.c.b16 %v1476, %v1470
    %v1933 = vpack.c.b16 %v1477, %v1471
    %v1934 = vpack.c.b16 %v1478, %v1472
    %v1935 = vpack.c.b16 %v1479, %v1473
    %v1936 = vpack.c.b16 %v1480, %v1474
    %v1937 = vpack.c.b16 %v1481, %v1475
    %v1938 = vpack.c.b16 %v1488, %v1482
    %v1939 = vpack.c.b16 %v1489, %v1483
    %v1940 = vpack.c.b16 %v1490, %v1484
    %v1941 = vpack.c.b16 %v1491, %v1485
    %v1942 = vpack.c.b16 %v1492, %v1486
    %v1943 = vpack.c.b16 %v1493, %v1487
    %v1944 = vpack.c.b16 %v1500, %v1494
    %v1945 = vpack.c.b16 %v1501, %v1495
    %v1946 = vpack.c.b16 %v1502, %v1496
    %v1947 = vpack.c.b16 %v1503, %v1497
    %v1948 = vpack.c.b16 %v1504, %v1498
    %v1949 = vpack.c.b16 %v1505, %v1499
    %v1950 = vpack.c.b16 %v1512, %v1506
    %v1951 = vpack.c.b16 %v1513, %v1507
    %v1952 = vpack.c.b16 %v1514, %v1508
    %v1953 = vpack.c.b16 %v1515, %v1509
    %v1954 = vpack.c.b16 %v1516, %v1510
    %v1955 = vpack.c.b16 %v1517, %v1511
    %v1956 = vpack.c.b16 %v1524, %v1518
    %v1957 = vpack.c.b16 %v1525, %v1519
    %v1958 = vpack.c.b16 %v1526, %v1520
    %v1959 = vpack.c.b16 %v1527, %v1521
    %v1960 = vpack.c.b16 %v1528, %v1522
    %v1961 = vpack.c.b16 %v1529, %v1523
    %v1962 = vpack.c.b16 %v1536, %v1530
    %v1963 = vpack.c.b16 %v1537, %v1531
    %v1964 = vpack.c.b16 %v1538, %v1532
    %v1965 = vpack.c.b16 %v1539, %v1533
    %v1966 = vpack.c.b16 %v1540, %v1534
    %v1967 = vpack.c.b16 %v1541, %v1535
    %v1968 = vpack.c.b16 %v1548, %v1542
    %v1969 = vpack.c.b16 %v1549, %v1543
    %v1970 = vpack.c.b16 %v1550, %v1544
    %v1971 = vpack.c.b16 %v1551, %v1545
    %v1972 = vpack.c.b16 %v1552, %v1546
    %v1973 = vpack.c.b16 %v1553, %v1547
    %v1974 = vpack.c.b16 %v1560, %v1554
    %v1975 = vpack.c.b16 %v1561, %v1555
    %v1976 = vpack.c.b16 %v1562, %v1556
    %v1977 = vpack.c.b16 %v1563, %v1557
    %v1978 = vpack.c.b16 %v1564, %v1558
    %v1979 = vpack.c.b16 %v1565, %v1559
    %v1980 = vpack.c.b16 %v1572, %v1566
    %v1981 = vpack.c.b16 %v1573, %v1567
    %v1982 = vpack.c.b16 %v1574, %v1568
    %v1983 = vpack.c.b16 %v1575, %v1569
    %v1984 = vpack.c.b16 %v1576, %v1570
    %v1985 = vpack.c.b16 %v1577, %v1571
    %v1986 = vpack.c.b16 %v1584, %v1578
    %v1987 = vpack.c.b16 %v1585, %v1579
    %v1988 = vpack.c.b16 %v1586, %v1580
    %v1989 = vpack.c.b16 %v1587, %v1581
    %v1990 = vpack.c.b16 %v1588, %v1582
    %v1991 = vpack.c.b16 %v1589, %v1583
    %v1992 = vpack.c.b16 %v1596, %v1590
    %v1993 = vpack.c.b16 %v1597, %v1591
    %v1994 = vpack.c.b16 %v1598, %v1592
    %v1995 = vpack.c.b16 %v1599, %v1593
    %v1996 = vpack.c.b16 %v1600, %v1594
    %v1997 = vpack.c.b16 %v1601, %v1595
    %v1998 = vpack.c.b16 %v1608, %v1602
    %v1999 = vpack.c.b16 %v1609, %v1603
    %v2000 = vpack.c.b16 %v1610, %v1604
    %v2001 = vpack.c.b16 %v1611, %v1605
    %v2002 = vpack.c.b16 %v1612, %v1606
    %v2003 = vpack.c.b16 %v1613, %v1607
    %v2004 = vpack.c.b16 %v1620, %v1614
    %v2005 = vpack.c.b16 %v1621, %v1615
    %v2006 = vpack.c.b16 %v1622, %v1616
    %v2007 = vpack.c.b16 %v1623, %v1617
    %v2008 = vpack.c.b16 %v1624, %v1618
    %v2009 = vpack.c.b16 %v1625, %v1619
    %2394 = vmatpush.bf16.msra.mxu0 %v1668
    %2395 = vmatpush.bf16.msra.mxu0 %v1662
    %2396 = vmatpush.bf16.msra.mxu0 %v1656
    %2397 = vmatpush.bf16.msra.mxu0 %v1650
    %2398 = vmatpush.bf16.msra.mxu0 %v1644
    %2399 = vmatpush.bf16.msra.mxu0 %v1638
    %2400 = vmatpush.bf16.msra.mxu0 %v1632
    %2401 = vmatpush.bf16.msra.mxu0 %v1626
    %2402 = vmatmul.bf16.gmra.mxu0 %v68
    %v2403 = vpop.f32.mrf.mxu0
    %v2404 = vadd.f32 %v462, %v2403
    %v2405 = vpop.f32.mrf.mxu0
    %2406 = vdwg.mxu0
    %2407 = vmatpush.bf16.msra.mxu0 %v1716
    %2408 = vmatpush.bf16.msra.mxu0 %v1710
    %2409 = vmatpush.bf16.msra.mxu0 %v1704
    %2410 = vmatpush.bf16.msra.mxu0 %v1698
    %2411 = vmatpush.bf16.msra.mxu0 %v1692
    %2412 = vmatpush.bf16.msra.mxu0 %v1686
    %2413 = vmatpush.bf16.msra.mxu0 %v1680
    %2414 = vmatpush.bf16.msra.mxu0 %v1674
    %2415 = vmatmul.bf16.gmra.mxu0 %v69
    %v2416 = vpop.f32.mrf.mxu0
    %v2417 = vadd.f32 %v2404, %v2416
    %v2418 = vpop.f32.mrf.mxu0
    %2419 = vdwg.mxu0
    %2420 = vmatpush.bf16.msra.mxu0 %v1764
    %2421 = vmatpush.bf16.msra.mxu0 %v1758
    %2422 = vmatpush.bf16.msra.mxu0 %v1752
    %2423 = vmatpush.bf16.msra.mxu0 %v1746
    %2424 = vmatpush.bf16.msra.mxu0 %v1740
    %2425 = vmatpush.bf16.msra.mxu0 %v1734
    %2426 = vmatpush.bf16.msra.mxu0 %v1728
    %2427 = vmatpush.bf16.msra.mxu0 %v1722
    %2428 = vmatmul.bf16.gmra.mxu0 %v70
    %v2429 = vpop.f32.mrf.mxu0
    %v2430 = vadd.f32 %v2417, %v2429
    %v2431 = vpop.f32.mrf.mxu0
    %2432 = vdwg.mxu0
    %2433 = vmatpush.bf16.msra.mxu0 %v1812
    %2434 = vmatpush.bf16.msra.mxu0 %v1806
    %2435 = vmatpush.bf16.msra.mxu0 %v1800
    %2436 = vmatpush.bf16.msra.mxu0 %v1794
    %2437 = vmatpush.bf16.msra.mxu0 %v1788
    %2438 = vmatpush.bf16.msra.mxu0 %v1782
    %2439 = vmatpush.bf16.msra.mxu0 %v1776
    %2440 = vmatpush.bf16.msra.mxu0 %v1770
    %2441 = vmatmul.bf16.gmra.mxu0 %v71
    %v2442 = vpop.f32.mrf.mxu0
    %v2443 = vadd.f32 %v2430, %v2442
    %v2444 = vpop.f32.mrf.mxu0
    %2445 = vdwg.mxu0
    %2446 = vmatpush.bf16.msra.mxu0 %v1860
    %2447 = vmatpush.bf16.msra.mxu0 %v1854
    %2448 = vmatpush.bf16.msra.mxu0 %v1848
    %2449 = vmatpush.bf16.msra.mxu0 %v1842
    %2450 = vmatpush.bf16.msra.mxu0 %v1836
    %2451 = vmatpush.bf16.msra.mxu0 %v1830
    %2452 = vmatpush.bf16.msra.mxu0 %v1824
    %2453 = vmatpush.bf16.msra.mxu0 %v1818
    %2454 = vmatmul.bf16.gmra.mxu0 %v72
    %v2455 = vpop.f32.mrf.mxu0
    %v2456 = vadd.f32 %v2443, %v2455
    %v2457 = vpop.f32.mrf.mxu0
    %2458 = vdwg.mxu0
    %2459 = vmatpush.bf16.msra.mxu0 %v1908
    %2460 = vmatpush.bf16.msra.mxu0 %v1902
    %2461 = vmatpush.bf16.msra.mxu0 %v1896
    %2462 = vmatpush.bf16.msra.mxu0 %v1890
    %2463 = vmatpush.bf16.msra.mxu0 %v1884
    %2464 = vmatpush.bf16.msra.mxu0 %v1878
    %2465 = vmatpush.bf16.msra.mxu0 %v1872
    %2466 = vmatpush.bf16.msra.mxu0 %v1866
    %2467 = vmatmul.bf16.gmra.mxu0 %v73
    %v2468 = vpop.f32.mrf.mxu0
    %v2469 = vadd.f32 %v2456, %v2468
    %v2470 = vpop.f32.mrf.mxu0
    %2471 = vdwg.mxu0
    %2472 = vmatpush.bf16.msra.mxu0 %v1956
    %2473 = vmatpush.bf16.msra.mxu0 %v1950
    %2474 = vmatpush.bf16.msra.mxu0 %v1944
    %2475 = vmatpush.bf16.msra.mxu0 %v1938
    %2476 = vmatpush.bf16.msra.mxu0 %v1932
    %2477 = vmatpush.bf16.msra.mxu0 %v1926
    %2478 = vmatpush.bf16.msra.mxu0 %v1920
    %2479 = vmatpush.bf16.msra.mxu0 %v1914
    %2480 = vmatmul.bf16.gmra.mxu0 %v74
    %v2481 = vpop.f32.mrf.mxu0
    %v2482 = vadd.f32 %v2469, %v2481
    %v2483 = vpop.f32.mrf.mxu0
    %2484 = vdwg.mxu0
    %2485 = vmatpush.bf16.msra.mxu0 %v2004
    %2486 = vmatpush.bf16.msra.mxu0 %v1998
    %2487 = vmatpush.bf16.msra.mxu0 %v1992
    %2488 = vmatpush.bf16.msra.mxu0 %v1986
    %2489 = vmatpush.bf16.msra.mxu0 %v1980
    %2490 = vmatpush.bf16.msra.mxu0 %v1974
    %2491 = vmatpush.bf16.msra.mxu0 %v1968
    %2492 = vmatpush.bf16.msra.mxu0 %v1962
    %2493 = vmatmul.bf16.gmra.mxu0 %v75
    %v2494 = vpop.f32.mrf.mxu0
    %v2495 = vadd.f32 %v2482, %v2494
    %v2496 = vpop.f32.mrf.mxu0
    %2497 = vdwg.mxu0
    %2498 = vmatpush.bf16.msra.mxu0 %v1669
    %2499 = vmatpush.bf16.msra.mxu0 %v1663
    %2500 = vmatpush.bf16.msra.mxu0 %v1657
    %2501 = vmatpush.bf16.msra.mxu0 %v1651
    %2502 = vmatpush.bf16.msra.mxu0 %v1645
    %2503 = vmatpush.bf16.msra.mxu0 %v1639
    %2504 = vmatpush.bf16.msra.mxu0 %v1633
    %2505 = vmatpush.bf16.msra.mxu0 %v1627
    %2506 = vmatmul.bf16.gmra.mxu0 %v68
    %v2507 = vpop.f32.mrf.mxu0
    %v2508 = vadd.f32 %v463, %v2507
    %v2509 = vpop.f32.mrf.mxu0
    %2510 = vdwg.mxu0
    %2511 = vmatpush.bf16.msra.mxu0 %v1717
    %2512 = vmatpush.bf16.msra.mxu0 %v1711
    %2513 = vmatpush.bf16.msra.mxu0 %v1705
    %2514 = vmatpush.bf16.msra.mxu0 %v1699
    %2515 = vmatpush.bf16.msra.mxu0 %v1693
    %2516 = vmatpush.bf16.msra.mxu0 %v1687
    %2517 = vmatpush.bf16.msra.mxu0 %v1681
    %2518 = vmatpush.bf16.msra.mxu0 %v1675
    %2519 = vmatmul.bf16.gmra.mxu0 %v69
    %v2520 = vpop.f32.mrf.mxu0
    %v2521 = vadd.f32 %v2508, %v2520
    %v2522 = vpop.f32.mrf.mxu0
    %2523 = vdwg.mxu0
    %2524 = vmatpush.bf16.msra.mxu0 %v1765
    %2525 = vmatpush.bf16.msra.mxu0 %v1759
    %2526 = vmatpush.bf16.msra.mxu0 %v1753
    %2527 = vmatpush.bf16.msra.mxu0 %v1747
    %2528 = vmatpush.bf16.msra.mxu0 %v1741
    %2529 = vmatpush.bf16.msra.mxu0 %v1735
    %2530 = vmatpush.bf16.msra.mxu0 %v1729
    %2531 = vmatpush.bf16.msra.mxu0 %v1723
    %2532 = vmatmul.bf16.gmra.mxu0 %v70
    %v2533 = vpop.f32.mrf.mxu0
    %v2534 = vadd.f32 %v2521, %v2533
    %v2535 = vpop.f32.mrf.mxu0
    %2536 = vdwg.mxu0
    %2537 = vmatpush.bf16.msra.mxu0 %v1813
    %2538 = vmatpush.bf16.msra.mxu0 %v1807
    %2539 = vmatpush.bf16.msra.mxu0 %v1801
    %2540 = vmatpush.bf16.msra.mxu0 %v1795
    %2541 = vmatpush.bf16.msra.mxu0 %v1789
    %2542 = vmatpush.bf16.msra.mxu0 %v1783
    %2543 = vmatpush.bf16.msra.mxu0 %v1777
    %2544 = vmatpush.bf16.msra.mxu0 %v1771
    %2545 = vmatmul.bf16.gmra.mxu0 %v71
    %v2546 = vpop.f32.mrf.mxu0
    %v2547 = vadd.f32 %v2534, %v2546
    %v2548 = vpop.f32.mrf.mxu0
    %2549 = vdwg.mxu0
    %2550 = vmatpush.bf16.msra.mxu0 %v1861
    %2551 = vmatpush.bf16.msra.mxu0 %v1855
    %2552 = vmatpush.bf16.msra.mxu0 %v1849
    %2553 = vmatpush.bf16.msra.mxu0 %v1843
    %2554 = vmatpush.bf16.msra.mxu0 %v1837
    %2555 = vmatpush.bf16.msra.mxu0 %v1831
    %2556 = vmatpush.bf16.msra.mxu0 %v1825
    %2557 = vmatpush.bf16.msra.mxu0 %v1819
    %2558 = vmatmul.bf16.gmra.mxu0 %v72
    %v2559 = vpop.f32.mrf.mxu0
    %v2560 = vadd.f32 %v2547, %v2559
    %v2561 = vpop.f32.mrf.mxu0
    %2562 = vdwg.mxu0
    %2563 = vmatpush.bf16.msra.mxu0 %v1909
    %2564 = vmatpush.bf16.msra.mxu0 %v1903
    %2565 = vmatpush.bf16.msra.mxu0 %v1897
    %2566 = vmatpush.bf16.msra.mxu0 %v1891
    %2567 = vmatpush.bf16.msra.mxu0 %v1885
    %2568 = vmatpush.bf16.msra.mxu0 %v1879
    %2569 = vmatpush.bf16.msra.mxu0 %v1873
    %2570 = vmatpush.bf16.msra.mxu0 %v1867
    %2571 = vmatmul.bf16.gmra.mxu0 %v73
    %v2572 = vpop.f32.mrf.mxu0
    %v2573 = vadd.f32 %v2560, %v2572
    %v2574 = vpop.f32.mrf.mxu0
    %2575 = vdwg.mxu0
    %2576 = vmatpush.bf16.msra.mxu0 %v1957
    %2577 = vmatpush.bf16.msra.mxu0 %v1951
    %2578 = vmatpush.bf16.msra.mxu0 %v1945
    %2579 = vmatpush.bf16.msra.mxu0 %v1939
    %2580 = vmatpush.bf16.msra.mxu0 %v1933
    %2581 = vmatpush.bf16.msra.mxu0 %v1927
    %2582 = vmatpush.bf16.msra.mxu0 %v1921
    %2583 = vmatpush.bf16.msra.mxu0 %v1915
    %2584 = vmatmul.bf16.gmra.mxu0 %v74
    %v2585 = vpop.f32.mrf.mxu0
    %v2586 = vadd.f32 %v2573, %v2585
    %v2587 = vpop.f32.mrf.mxu0
    %2588 = vdwg.mxu0
    %2589 = vmatpush.bf16.msra.mxu0 %v2005
    %2590 = vmatpush.bf16.msra.mxu0 %v1999
    %2591 = vmatpush.bf16.msra.mxu0 %v1993
    %2592 = vmatpush.bf16.msra.mxu0 %v1987
    %2593 = vmatpush.bf16.msra.mxu0 %v1981
    %2594 = vmatpush.bf16.msra.mxu0 %v1975
    %2595 = vmatpush.bf16.msra.mxu0 %v1969
    %2596 = vmatpush.bf16.msra.mxu0 %v1963
    %2597 = vmatmul.bf16.gmra.mxu0 %v75
    %v2598 = vpop.f32.mrf.mxu0
    %v2599 = vadd.f32 %v2586, %v2598
    %v2600 = vpop.f32.mrf.mxu0
    %2601 = vdwg.mxu0
    %2602 = vmatpush.bf16.msra.mxu0 %v1670
    %2603 = vmatpush.bf16.msra.mxu0 %v1664
    %2604 = vmatpush.bf16.msra.mxu0 %v1658
    %2605 = vmatpush.bf16.msra.mxu0 %v1652
    %2606 = vmatpush.bf16.msra.mxu0 %v1646
    %2607 = vmatpush.bf16.msra.mxu0 %v1640
    %2608 = vmatpush.bf16.msra.mxu0 %v1634
    %2609 = vmatpush.bf16.msra.mxu0 %v1628
    %2610 = vmatmul.bf16.gmra.mxu0 %v68
    %v2611 = vpop.f32.mrf.mxu0
    %v2612 = vadd.f32 %v464, %v2611
    %v2613 = vpop.f32.mrf.mxu0
    %2614 = vdwg.mxu0
    %2615 = vmatpush.bf16.msra.mxu0 %v1718
    %2616 = vmatpush.bf16.msra.mxu0 %v1712
    %2617 = vmatpush.bf16.msra.mxu0 %v1706
    %2618 = vmatpush.bf16.msra.mxu0 %v1700
    %2619 = vmatpush.bf16.msra.mxu0 %v1694
    %2620 = vmatpush.bf16.msra.mxu0 %v1688
    %2621 = vmatpush.bf16.msra.mxu0 %v1682
    %2622 = vmatpush.bf16.msra.mxu0 %v1676
    %2623 = vmatmul.bf16.gmra.mxu0 %v69
    %v2624 = vpop.f32.mrf.mxu0
    %v2625 = vadd.f32 %v2612, %v2624
    %v2626 = vpop.f32.mrf.mxu0
    %2627 = vdwg.mxu0
    %2628 = vmatpush.bf16.msra.mxu0 %v1766
    %2629 = vmatpush.bf16.msra.mxu0 %v1760
    %2630 = vmatpush.bf16.msra.mxu0 %v1754
    %2631 = vmatpush.bf16.msra.mxu0 %v1748
    %2632 = vmatpush.bf16.msra.mxu0 %v1742
    %2633 = vmatpush.bf16.msra.mxu0 %v1736
    %2634 = vmatpush.bf16.msra.mxu0 %v1730
    %2635 = vmatpush.bf16.msra.mxu0 %v1724
    %2636 = vmatmul.bf16.gmra.mxu0 %v70
    %v2637 = vpop.f32.mrf.mxu0
    %v2638 = vadd.f32 %v2625, %v2637
    %v2639 = vpop.f32.mrf.mxu0
    %2640 = vdwg.mxu0
    %2641 = vmatpush.bf16.msra.mxu0 %v1814
    %2642 = vmatpush.bf16.msra.mxu0 %v1808
    %2643 = vmatpush.bf16.msra.mxu0 %v1802
    %2644 = vmatpush.bf16.msra.mxu0 %v1796
    %2645 = vmatpush.bf16.msra.mxu0 %v1790
    %2646 = vmatpush.bf16.msra.mxu0 %v1784
    %2647 = vmatpush.bf16.msra.mxu0 %v1778
    %2648 = vmatpush.bf16.msra.mxu0 %v1772
    %2649 = vmatmul.bf16.gmra.mxu0 %v71
    %v2650 = vpop.f32.mrf.mxu0
    %v2651 = vadd.f32 %v2638, %v2650
    %v2652 = vpop.f32.mrf.mxu0
    %2653 = vdwg.mxu0
    %2654 = vmatpush.bf16.msra.mxu0 %v1862
    %2655 = vmatpush.bf16.msra.mxu0 %v1856
    %2656 = vmatpush.bf16.msra.mxu0 %v1850
    %2657 = vmatpush.bf16.msra.mxu0 %v1844
    %2658 = vmatpush.bf16.msra.mxu0 %v1838
    %2659 = vmatpush.bf16.msra.mxu0 %v1832
    %2660 = vmatpush.bf16.msra.mxu0 %v1826
    %2661 = vmatpush.bf16.msra.mxu0 %v1820
    %2662 = vmatmul.bf16.gmra.mxu0 %v72
    %v2663 = vpop.f32.mrf.mxu0
    %v2664 = vadd.f32 %v2651, %v2663
    %v2665 = vpop.f32.mrf.mxu0
    %2666 = vdwg.mxu0
    %2667 = vmatpush.bf16.msra.mxu0 %v1910
    %2668 = vmatpush.bf16.msra.mxu0 %v1904
    %2669 = vmatpush.bf16.msra.mxu0 %v1898
    %2670 = vmatpush.bf16.msra.mxu0 %v1892
    %2671 = vmatpush.bf16.msra.mxu0 %v1886
    %2672 = vmatpush.bf16.msra.mxu0 %v1880
    %2673 = vmatpush.bf16.msra.mxu0 %v1874
    %2674 = vmatpush.bf16.msra.mxu0 %v1868
    %2675 = vmatmul.bf16.gmra.mxu0 %v73
    %v2676 = vpop.f32.mrf.mxu0
    %v2677 = vadd.f32 %v2664, %v2676
    %v2678 = vpop.f32.mrf.mxu0
    %2679 = vdwg.mxu0
    %2680 = vmatpush.bf16.msra.mxu0 %v1958
    %2681 = vmatpush.bf16.msra.mxu0 %v1952
    %2682 = vmatpush.bf16.msra.mxu0 %v1946
    %2683 = vmatpush.bf16.msra.mxu0 %v1940
    %2684 = vmatpush.bf16.msra.mxu0 %v1934
    %2685 = vmatpush.bf16.msra.mxu0 %v1928
    %2686 = vmatpush.bf16.msra.mxu0 %v1922
    %2687 = vmatpush.bf16.msra.mxu0 %v1916
    %2688 = vmatmul.bf16.gmra.mxu0 %v74
    %v2689 = vpop.f32.mrf.mxu0
    %v2690 = vadd.f32 %v2677, %v2689
    %v2691 = vpop.f32.mrf.mxu0
    %2692 = vdwg.mxu0
    %2693 = vmatpush.bf16.msra.mxu0 %v2006
    %2694 = vmatpush.bf16.msra.mxu0 %v2000
    %2695 = vmatpush.bf16.msra.mxu0 %v1994
    %2696 = vmatpush.bf16.msra.mxu0 %v1988
    %2697 = vmatpush.bf16.msra.mxu0 %v1982
    %2698 = vmatpush.bf16.msra.mxu0 %v1976
    %2699 = vmatpush.bf16.msra.mxu0 %v1970
    %2700 = vmatpush.bf16.msra.mxu0 %v1964
    %2701 = vmatmul.bf16.gmra.mxu0 %v75
    %v2702 = vpop.f32.mrf.mxu0
    %v2703 = vadd.f32 %v2690, %v2702
    %v2704 = vpop.f32.mrf.mxu0
    %2705 = vdwg.mxu0
    %2706 = vmatpush.bf16.msra.mxu0 %v1671
    %2707 = vmatpush.bf16.msra.mxu0 %v1665
    %2708 = vmatpush.bf16.msra.mxu0 %v1659
    %2709 = vmatpush.bf16.msra.mxu0 %v1653
    %2710 = vmatpush.bf16.msra.mxu0 %v1647
    %2711 = vmatpush.bf16.msra.mxu0 %v1641
    %2712 = vmatpush.bf16.msra.mxu0 %v1635
    %2713 = vmatpush.bf16.msra.mxu0 %v1629
    %2714 = vmatmul.bf16.gmra.mxu0 %v68
    %v2715 = vpop.f32.mrf.mxu0
    %v2716 = vadd.f32 %v465, %v2715
    %v2717 = vpop.f32.mrf.mxu0
    %2718 = vdwg.mxu0
    %2719 = vmatpush.bf16.msra.mxu0 %v1719
    %2720 = vmatpush.bf16.msra.mxu0 %v1713
    %2721 = vmatpush.bf16.msra.mxu0 %v1707
    %2722 = vmatpush.bf16.msra.mxu0 %v1701
    %2723 = vmatpush.bf16.msra.mxu0 %v1695
    %2724 = vmatpush.bf16.msra.mxu0 %v1689
    %2725 = vmatpush.bf16.msra.mxu0 %v1683
    %2726 = vmatpush.bf16.msra.mxu0 %v1677
    %2727 = vmatmul.bf16.gmra.mxu0 %v69
    %v2728 = vpop.f32.mrf.mxu0
    %v2729 = vadd.f32 %v2716, %v2728
    %v2730 = vpop.f32.mrf.mxu0
    %2731 = vdwg.mxu0
    %2732 = vmatpush.bf16.msra.mxu0 %v1767
    %2733 = vmatpush.bf16.msra.mxu0 %v1761
    %2734 = vmatpush.bf16.msra.mxu0 %v1755
    %2735 = vmatpush.bf16.msra.mxu0 %v1749
    %2736 = vmatpush.bf16.msra.mxu0 %v1743
    %2737 = vmatpush.bf16.msra.mxu0 %v1737
    %2738 = vmatpush.bf16.msra.mxu0 %v1731
    %2739 = vmatpush.bf16.msra.mxu0 %v1725
    %2740 = vmatmul.bf16.gmra.mxu0 %v70
    %v2741 = vpop.f32.mrf.mxu0
    %v2742 = vadd.f32 %v2729, %v2741
    %v2743 = vpop.f32.mrf.mxu0
    %2744 = vdwg.mxu0
    %2745 = vmatpush.bf16.msra.mxu0 %v1815
    %2746 = vmatpush.bf16.msra.mxu0 %v1809
    %2747 = vmatpush.bf16.msra.mxu0 %v1803
    %2748 = vmatpush.bf16.msra.mxu0 %v1797
    %2749 = vmatpush.bf16.msra.mxu0 %v1791
    %2750 = vmatpush.bf16.msra.mxu0 %v1785
    %2751 = vmatpush.bf16.msra.mxu0 %v1779
    %2752 = vmatpush.bf16.msra.mxu0 %v1773
    %2753 = vmatmul.bf16.gmra.mxu0 %v71
    %v2754 = vpop.f32.mrf.mxu0
    %v2755 = vadd.f32 %v2742, %v2754
    %v2756 = vpop.f32.mrf.mxu0
    %2757 = vdwg.mxu0
    %2758 = vmatpush.bf16.msra.mxu0 %v1863
    %2759 = vmatpush.bf16.msra.mxu0 %v1857
    %2760 = vmatpush.bf16.msra.mxu0 %v1851
    %2761 = vmatpush.bf16.msra.mxu0 %v1845
    %2762 = vmatpush.bf16.msra.mxu0 %v1839
    %2763 = vmatpush.bf16.msra.mxu0 %v1833
    %2764 = vmatpush.bf16.msra.mxu0 %v1827
    %2765 = vmatpush.bf16.msra.mxu0 %v1821
    %2766 = vmatmul.bf16.gmra.mxu0 %v72
    %v2767 = vpop.f32.mrf.mxu0
    %v2768 = vadd.f32 %v2755, %v2767
    %v2769 = vpop.f32.mrf.mxu0
    %2770 = vdwg.mxu0
    %2771 = vmatpush.bf16.msra.mxu0 %v1911
    %2772 = vmatpush.bf16.msra.mxu0 %v1905
    %2773 = vmatpush.bf16.msra.mxu0 %v1899
    %2774 = vmatpush.bf16.msra.mxu0 %v1893
    %2775 = vmatpush.bf16.msra.mxu0 %v1887
    %2776 = vmatpush.bf16.msra.mxu0 %v1881
    %2777 = vmatpush.bf16.msra.mxu0 %v1875
    %2778 = vmatpush.bf16.msra.mxu0 %v1869
    %2779 = vmatmul.bf16.gmra.mxu0 %v73
    %v2780 = vpop.f32.mrf.mxu0
    %v2781 = vadd.f32 %v2768, %v2780
    %v2782 = vpop.f32.mrf.mxu0
    %2783 = vdwg.mxu0
    %2784 = vmatpush.bf16.msra.mxu0 %v1959
    %2785 = vmatpush.bf16.msra.mxu0 %v1953
    %2786 = vmatpush.bf16.msra.mxu0 %v1947
    %2787 = vmatpush.bf16.msra.mxu0 %v1941
    %2788 = vmatpush.bf16.msra.mxu0 %v1935
    %2789 = vmatpush.bf16.msra.mxu0 %v1929
    %2790 = vmatpush.bf16.msra.mxu0 %v1923
    %2791 = vmatpush.bf16.msra.mxu0 %v1917
    %2792 = vmatmul.bf16.gmra.mxu0 %v74
    %v2793 = vpop.f32.mrf.mxu0
    %v2794 = vadd.f32 %v2781, %v2793
    %v2795 = vpop.f32.mrf.mxu0
    %2796 = vdwg.mxu0
    %2797 = vmatpush.bf16.msra.mxu0 %v2007
    %2798 = vmatpush.bf16.msra.mxu0 %v2001
    %2799 = vmatpush.bf16.msra.mxu0 %v1995
    %2800 = vmatpush.bf16.msra.mxu0 %v1989
    %2801 = vmatpush.bf16.msra.mxu0 %v1983
    %2802 = vmatpush.bf16.msra.mxu0 %v1977
    %2803 = vmatpush.bf16.msra.mxu0 %v1971
    %2804 = vmatpush.bf16.msra.mxu0 %v1965
    %2805 = vmatmul.bf16.gmra.mxu0 %v75
    %v2806 = vpop.f32.mrf.mxu0
    %v2807 = vadd.f32 %v2794, %v2806
    %v2808 = vpop.f32.mrf.mxu0
    %2809 = vdwg.mxu0
    %2810 = vmatpush.bf16.msra.mxu0 %v1672
    %2811 = vmatpush.bf16.msra.mxu0 %v1666
    %2812 = vmatpush.bf16.msra.mxu0 %v1660
    %2813 = vmatpush.bf16.msra.mxu0 %v1654
    %2814 = vmatpush.bf16.msra.mxu0 %v1648
    %2815 = vmatpush.bf16.msra.mxu0 %v1642
    %2816 = vmatpush.bf16.msra.mxu0 %v1636
    %2817 = vmatpush.bf16.msra.mxu0 %v1630
    %2818 = vmatmul.bf16.gmra.mxu0 %v68
    %v2819 = vpop.f32.mrf.mxu0
    %v2820 = vadd.f32 %v466, %v2819
    %v2821 = vpop.f32.mrf.mxu0
    %2822 = vdwg.mxu0
    %2823 = vmatpush.bf16.msra.mxu0 %v1720
    %2824 = vmatpush.bf16.msra.mxu0 %v1714
    %2825 = vmatpush.bf16.msra.mxu0 %v1708
    %2826 = vmatpush.bf16.msra.mxu0 %v1702
    %2827 = vmatpush.bf16.msra.mxu0 %v1696
    %2828 = vmatpush.bf16.msra.mxu0 %v1690
    %2829 = vmatpush.bf16.msra.mxu0 %v1684
    %2830 = vmatpush.bf16.msra.mxu0 %v1678
    %2831 = vmatmul.bf16.gmra.mxu0 %v69
    %v2832 = vpop.f32.mrf.mxu0
    %v2833 = vadd.f32 %v2820, %v2832
    %v2834 = vpop.f32.mrf.mxu0
    %2835 = vdwg.mxu0
    %2836 = vmatpush.bf16.msra.mxu0 %v1768
    %2837 = vmatpush.bf16.msra.mxu0 %v1762
    %2838 = vmatpush.bf16.msra.mxu0 %v1756
    %2839 = vmatpush.bf16.msra.mxu0 %v1750
    %2840 = vmatpush.bf16.msra.mxu0 %v1744
    %2841 = vmatpush.bf16.msra.mxu0 %v1738
    %2842 = vmatpush.bf16.msra.mxu0 %v1732
    %2843 = vmatpush.bf16.msra.mxu0 %v1726
    %2844 = vmatmul.bf16.gmra.mxu0 %v70
    %v2845 = vpop.f32.mrf.mxu0
    %v2846 = vadd.f32 %v2833, %v2845
    %v2847 = vpop.f32.mrf.mxu0
    %2848 = vdwg.mxu0
    %2849 = vmatpush.bf16.msra.mxu0 %v1816
    %2850 = vmatpush.bf16.msra.mxu0 %v1810
    %2851 = vmatpush.bf16.msra.mxu0 %v1804
    %2852 = vmatpush.bf16.msra.mxu0 %v1798
    %2853 = vmatpush.bf16.msra.mxu0 %v1792
    %2854 = vmatpush.bf16.msra.mxu0 %v1786
    %2855 = vmatpush.bf16.msra.mxu0 %v1780
    %2856 = vmatpush.bf16.msra.mxu0 %v1774
    %2857 = vmatmul.bf16.gmra.mxu0 %v71
    %v2858 = vpop.f32.mrf.mxu0
    %v2859 = vadd.f32 %v2846, %v2858
    %v2860 = vpop.f32.mrf.mxu0
    %2861 = vdwg.mxu0
    %2862 = vmatpush.bf16.msra.mxu0 %v1864
    %2863 = vmatpush.bf16.msra.mxu0 %v1858
    %2864 = vmatpush.bf16.msra.mxu0 %v1852
    %2865 = vmatpush.bf16.msra.mxu0 %v1846
    %2866 = vmatpush.bf16.msra.mxu0 %v1840
    %2867 = vmatpush.bf16.msra.mxu0 %v1834
    %2868 = vmatpush.bf16.msra.mxu0 %v1828
    %2869 = vmatpush.bf16.msra.mxu0 %v1822
    %2870 = vmatmul.bf16.gmra.mxu0 %v72
    %v2871 = vpop.f32.mrf.mxu0
    %v2872 = vadd.f32 %v2859, %v2871
    %v2873 = vpop.f32.mrf.mxu0
    %2874 = vdwg.mxu0
    %2875 = vmatpush.bf16.msra.mxu0 %v1912
    %2876 = vmatpush.bf16.msra.mxu0 %v1906
    %2877 = vmatpush.bf16.msra.mxu0 %v1900
    %2878 = vmatpush.bf16.msra.mxu0 %v1894
    %2879 = vmatpush.bf16.msra.mxu0 %v1888
    %2880 = vmatpush.bf16.msra.mxu0 %v1882
    %2881 = vmatpush.bf16.msra.mxu0 %v1876
    %2882 = vmatpush.bf16.msra.mxu0 %v1870
    %2883 = vmatmul.bf16.gmra.mxu0 %v73
    %v2884 = vpop.f32.mrf.mxu0
    %v2885 = vadd.f32 %v2872, %v2884
    %v2886 = vpop.f32.mrf.mxu0
    %2887 = vdwg.mxu0
    %2888 = vmatpush.bf16.msra.mxu0 %v1960
    %2889 = vmatpush.bf16.msra.mxu0 %v1954
    %2890 = vmatpush.bf16.msra.mxu0 %v1948
    %2891 = vmatpush.bf16.msra.mxu0 %v1942
    %2892 = vmatpush.bf16.msra.mxu0 %v1936
    %2893 = vmatpush.bf16.msra.mxu0 %v1930
    %2894 = vmatpush.bf16.msra.mxu0 %v1924
    %2895 = vmatpush.bf16.msra.mxu0 %v1918
    %2896 = vmatmul.bf16.gmra.mxu0 %v74
    %v2897 = vpop.f32.mrf.mxu0
    %v2898 = vadd.f32 %v2885, %v2897
    %v2899 = vpop.f32.mrf.mxu0
    %2900 = vdwg.mxu0
    %2901 = vmatpush.bf16.msra.mxu0 %v2008
    %2902 = vmatpush.bf16.msra.mxu0 %v2002
    %2903 = vmatpush.bf16.msra.mxu0 %v1996
    %2904 = vmatpush.bf16.msra.mxu0 %v1990
    %2905 = vmatpush.bf16.msra.mxu0 %v1984
    %2906 = vmatpush.bf16.msra.mxu0 %v1978
    %2907 = vmatpush.bf16.msra.mxu0 %v1972
    %2908 = vmatpush.bf16.msra.mxu0 %v1966
    %2909 = vmatmul.bf16.gmra.mxu0 %v75
    %v2910 = vpop.f32.mrf.mxu0
    %v2911 = vadd.f32 %v2898, %v2910
    %v2912 = vpop.f32.mrf.mxu0
    %2913 = vdwg.mxu0
    %2914 = vmatpush.bf16.msra.mxu0 %v1673
    %2915 = vmatpush.bf16.msra.mxu0 %v1667
    %2916 = vmatpush.bf16.msra.mxu0 %v1661
    %2917 = vmatpush.bf16.msra.mxu0 %v1655
    %2918 = vmatpush.bf16.msra.mxu0 %v1649
    %2919 = vmatpush.bf16.msra.mxu0 %v1643
    %2920 = vmatpush.bf16.msra.mxu0 %v1637
    %2921 = vmatpush.bf16.msra.mxu0 %v1631
    %2922 = vmatmul.bf16.gmra.mxu0 %v68
    %v2923 = vpop.f32.mrf.mxu0
    %v2924 = vadd.f32 %v467, %v2923
    %v2925 = vpop.f32.mrf.mxu0
    %2926 = vdwg.mxu0
    %2927 = vmatpush.bf16.msra.mxu0 %v1721
    %2928 = vmatpush.bf16.msra.mxu0 %v1715
    %2929 = vmatpush.bf16.msra.mxu0 %v1709
    %2930 = vmatpush.bf16.msra.mxu0 %v1703
    %2931 = vmatpush.bf16.msra.mxu0 %v1697
    %2932 = vmatpush.bf16.msra.mxu0 %v1691
    %2933 = vmatpush.bf16.msra.mxu0 %v1685
    %2934 = vmatpush.bf16.msra.mxu0 %v1679
    %2935 = vmatmul.bf16.gmra.mxu0 %v69
    %v2936 = vpop.f32.mrf.mxu0
    %v2937 = vadd.f32 %v2924, %v2936
    %v2938 = vpop.f32.mrf.mxu0
    %2939 = vdwg.mxu0
    %2940 = vmatpush.bf16.msra.mxu0 %v1769
    %2941 = vmatpush.bf16.msra.mxu0 %v1763
    %2942 = vmatpush.bf16.msra.mxu0 %v1757
    %2943 = vmatpush.bf16.msra.mxu0 %v1751
    %2944 = vmatpush.bf16.msra.mxu0 %v1745
    %2945 = vmatpush.bf16.msra.mxu0 %v1739
    %2946 = vmatpush.bf16.msra.mxu0 %v1733
    %2947 = vmatpush.bf16.msra.mxu0 %v1727
    %2948 = vmatmul.bf16.gmra.mxu0 %v70
    %v2949 = vpop.f32.mrf.mxu0
    %v2950 = vadd.f32 %v2937, %v2949
    %v2951 = vpop.f32.mrf.mxu0
    %2952 = vdwg.mxu0
    %2953 = vmatpush.bf16.msra.mxu0 %v1817
    %2954 = vmatpush.bf16.msra.mxu0 %v1811
    %2955 = vmatpush.bf16.msra.mxu0 %v1805
    %2956 = vmatpush.bf16.msra.mxu0 %v1799
    %2957 = vmatpush.bf16.msra.mxu0 %v1793
    %2958 = vmatpush.bf16.msra.mxu0 %v1787
    %2959 = vmatpush.bf16.msra.mxu0 %v1781
    %2960 = vmatpush.bf16.msra.mxu0 %v1775
    %2961 = vmatmul.bf16.gmra.mxu0 %v71
    %v2962 = vpop.f32.mrf.mxu0
    %v2963 = vadd.f32 %v2950, %v2962
    %v2964 = vpop.f32.mrf.mxu0
    %2965 = vdwg.mxu0
    %2966 = vmatpush.bf16.msra.mxu0 %v1865
    %2967 = vmatpush.bf16.msra.mxu0 %v1859
    %2968 = vmatpush.bf16.msra.mxu0 %v1853
    %2969 = vmatpush.bf16.msra.mxu0 %v1847
    %2970 = vmatpush.bf16.msra.mxu0 %v1841
    %2971 = vmatpush.bf16.msra.mxu0 %v1835
    %2972 = vmatpush.bf16.msra.mxu0 %v1829
    %2973 = vmatpush.bf16.msra.mxu0 %v1823
    %2974 = vmatmul.bf16.gmra.mxu0 %v72
    %v2975 = vpop.f32.mrf.mxu0
    %v2976 = vadd.f32 %v2963, %v2975
    %v2977 = vpop.f32.mrf.mxu0
    %2978 = vdwg.mxu0
    %2979 = vmatpush.bf16.msra.mxu0 %v1913
    %2980 = vmatpush.bf16.msra.mxu0 %v1907
    %2981 = vmatpush.bf16.msra.mxu0 %v1901
    %2982 = vmatpush.bf16.msra.mxu0 %v1895
    %2983 = vmatpush.bf16.msra.mxu0 %v1889
    %2984 = vmatpush.bf16.msra.mxu0 %v1883
    %2985 = vmatpush.bf16.msra.mxu0 %v1877
    %2986 = vmatpush.bf16.msra.mxu0 %v1871
    %2987 = vmatmul.bf16.gmra.mxu0 %v73
    %v2988 = vpop.f32.mrf.mxu0
    %v2989 = vadd.f32 %v2976, %v2988
    %v2990 = vpop.f32.mrf.mxu0
    %2991 = vdwg.mxu0
    %2992 = vmatpush.bf16.msra.mxu0 %v1961
    %2993 = vmatpush.bf16.msra.mxu0 %v1955
    %2994 = vmatpush.bf16.msra.mxu0 %v1949
    %2995 = vmatpush.bf16.msra.mxu0 %v1943
    %2996 = vmatpush.bf16.msra.mxu0 %v1937
    %2997 = vmatpush.bf16.msra.mxu0 %v1931
    %2998 = vmatpush.bf16.msra.mxu0 %v1925
    %2999 = vmatpush.bf16.msra.mxu0 %v1919
    %3000 = vmatmul.bf16.gmra.mxu0 %v74
    %v3001 = vpop.f32.mrf.mxu0
    %v3002 = vadd.f32 %v2989, %v3001
    %v3003 = vpop.f32.mrf.mxu0
    %3004 = vdwg.mxu0
    %3005 = vmatpush.bf16.msra.mxu0 %v2009
    %3006 = vmatpush.bf16.msra.mxu0 %v2003
    %3007 = vmatpush.bf16.msra.mxu0 %v1997
    %3008 = vmatpush.bf16.msra.mxu0 %v1991
    %3009 = vmatpush.bf16.msra.mxu0 %v1985
    %3010 = vmatpush.bf16.msra.mxu0 %v1979
    %3011 = vmatpush.bf16.msra.mxu0 %v1973
    %3012 = vmatpush.bf16.msra.mxu0 %v1967
    %3013 = vmatmul.bf16.gmra.mxu0 %v75
    %v3014 = vpop.f32.mrf.mxu0
    %v3015 = vadd.f32 %v3002, %v3014
    %v3016 = vpop.f32.mrf.mxu0
    %3017 = vdwg.mxu0
    %v3018 = vtanh.pop %v2495
    %v3019 = vtanh.pop %v2599
    %v3020 = vtanh.pop %v2703
    %v3021 = vtanh.pop %v2807
    %v3022 = vtanh.pop %v2911
    %v3023 = vtanh.pop %v3015
    %3024 = vst [vmem:[#allocation10] sm:$0xff] %v3018
    %3025 = vst [vmem:[#allocation10 + $0x8] sm:$0xff] %v3019
    %3026 = vst [vmem:[#allocation10 + $0x10] sm:$0xff] %v3020
    %3027 = vst [vmem:[#allocation10 + $0x18] sm:$0xff] %v3021
    %3028 = vst [vmem:[#allocation10 + $0x20] sm:$0xff] %v3022
    %3029 = vst [vmem:[#allocation10 + $0x28] sm:$0xff] %v3023
    // Predicated region
    $region26: #{tpu_custom_call.1} parent=1 // pred_check
      _
    $region27: #{tpu_custom_call.1} parent=1 // pred_check_branch
      %3031 = sbr.rel (0) target = $region29
    $region28: #{tpu_custom_call.1} parent=1 // pred_region
      %3033 = vsyncadd [#allocation6], 0
      %s3035 = sshll.u32 [#allocation10], 4
      %s3036 = int_to_ptr.vmem [resolvable:$true] %s3035
      %s3037 = sshll.u32 %s4, 4
      %s3038 = int_to_ptr.hbm [resolvable:$true] %s3037
      %3040 = dma.vmem_to_hbm [thread:$0]  %s3036, 768, %s3038, [#allocation6]
    $region29: #{tpu_custom_call.1} parent=1 // pred_fallthru
      _
    // Predicated region
    $region30: #{tpu_custom_call.1} parent=1 // pred_check
      _
    $region31: #{tpu_custom_call.1} parent=1 // pred_check_branch
      %3042 = sbr.rel (0) target = $region33
    $region32: #{tpu_custom_call.1} parent=1 // pred_region
      %3044 = dma.done [#allocation6], 768
    $region33: #{tpu_custom_call.1} parent=1 // pred_fallthru
      _
    %3045 = vsyncpa [#allocation5], 1
    %3046 = vsyncpa [#allocation8], 1
    %3047 = vsyncpa [#allocation6], 1

</llo_original>
